<compile_context>
chip_gen: v6e
topology: v6e:2x2x1
jax: 0.10.0
libtpu: 0.0.40
codegen_flags: <defaults>
</compile_context>

<pallas_src>
import math
import jax
import jax.numpy as jnp
from jax.experimental import pallas as pl
from jax.experimental.pallas import tpu as pltpu  # noqa: F401  (TPU backend)

# ----------------------------- model dims (small) -----------------------------
B = 2            # batch
S = 8            # sequence length
H = 32           # hidden size
NUM_HEADS = 2
HEAD_DIM = H // NUM_HEADS
FFN = 64         # intermediate size
NUM_LAYERS = 2
VOCAB = 50
MAX_POS = S
NUM_CLASSES = 4
NC_PAD = 128     # lane-dense classifier output width; sliced back to NUM_CLASSES
LN_EPS = 1e-5
BS = B * S       # batch folded into rows


# ------------------------------- kernel helpers -------------------------------
def _layernorm(x, gamma, beta):
    # x: (rows, H), gamma/beta: (1, H)
    mean = jnp.mean(x, axis=-1, keepdims=True)
    var = jnp.mean(jnp.square(x - mean), axis=-1, keepdims=True)
    inv = jax.lax.rsqrt(var + LN_EPS)
    return (x - mean) * inv * gamma + beta


def _gelu(x):
    # TODO(synk): HF RoBERTa uses erf-GELU; tanh approximation used here.
    c = math.sqrt(2.0 / math.pi)
    return 0.5 * x * (1.0 + jnp.tanh(c * (x + 0.044715 * x * x * x)))


# ------------------------------ fused forward kernel ---------------------------
def fused_forward_kernel(ids_ref, bias_ref, wemb_ref, femb_ref, embln_ref,
                         wqkv_ref, bqkv_ref, wo_ref, w1_ref, b1_ref, w2_ref,
                         vecs_ref, clsw_ref, clsb_ref, out_ref):
    f32 = jnp.float32

    # ---- embeddings: word gather as one-hot matmul (MXU) + pos/type + LayerNorm
    ids = ids_ref[...]                                              # (BS, 1) int32
    vocab_iota = jax.lax.broadcasted_iota(jnp.int32, (BS, VOCAB), 1)
    one_hot = (vocab_iota == ids).astype(f32)                       # (BS, VOCAB)
    word = jnp.dot(one_hot, wemb_ref[...], preferred_element_type=f32)
    x = _layernorm(word + femb_ref[...],
                   embln_ref[0:1, :], embln_ref[1:2, :])            # (BS, H)

    bias = bias_ref[...]       # (BS, BS) block-diagonal + key-padding additive bias
    scale = 1.0 / math.sqrt(HEAD_DIM)

    # ---- encoder layers: static loop, all weights VMEM-resident -------------
    for layer in range(NUM_LAYERS):
        vecs = vecs_ref[layer]          # (6, H): bo, ln1g, ln1b, b2, ln2g, ln2b

        # fused QKV projection: one (BS,H)@(H,3H) MXU push
        qkv = (jnp.dot(x, wqkv_ref[layer], preferred_element_type=f32)
               + bqkv_ref[layer])                                   # (BS, 3H)

        attn_out = jnp.zeros((BS, H), f32)
        for h in range(NUM_HEADS):      # static; slices are static lane extracts
            lo = h * HEAD_DIM
            q_h = qkv[:, lo:lo + HEAD_DIM]
            k_h = qkv[:, H + lo:H + lo + HEAD_DIM]
            v_h = qkv[:, 2 * H + lo:2 * H + lo + HEAD_DIM]
            # q @ k^T with the transpose folded into dot_general dimension numbers
            scores = jax.lax.dot_general(
                q_h, k_h, (((1,), (1,)), ((), ())),
                preferred_element_type=f32) * scale + bias          # (BS, BS)
            m = jnp.max(scores, axis=-1, keepdims=True)
            p = jnp.exp(scores - m)
            denom = jnp.sum(p, axis=-1, keepdims=True)
            p = p * pl.reciprocal(denom, approx=True)               # EUP slot
            ctx_h = jnp.dot(p, v_h, preferred_element_type=f32)     # (BS, HEAD_DIM)
            # accumulate through this head's block of Wo (avoids lane concat)
            attn_out = attn_out + jnp.dot(ctx_h, wo_ref[layer, h],
                                          preferred_element_type=f32)
        attn_out = attn_out + vecs[0:1, :]                          # + bo

        h1 = _layernorm(x + attn_out, vecs[1:2, :], vecs[2:3, :])

        ff = jnp.dot(h1, w1_ref[layer], preferred_element_type=f32) + b1_ref[layer]
        ff = _gelu(ff)
        ff = jnp.dot(ff, w2_ref[layer], preferred_element_type=f32) + vecs[3:4, :]

        x = _layernorm(h1 + ff, vecs[4:5, :], vecs[5:6, :])

    # ---- CLS pooling (rows b*S) via one-hot row selection on the MXU ---------
    r = jax.lax.broadcasted_iota(jnp.int32, (B, BS), 0)
    c = jax.lax.broadcasted_iota(jnp.int32, (B, BS), 1)
    sel = (c == r * S).astype(f32)                                  # (B, BS)
    pooled = jnp.dot(sel, x, preferred_element_type=f32)            # (B, H)

    # nn.Dropout(0.1) is identity at inference time.
    out_ref[...] = (jnp.dot(pooled, clsw_ref[...],
                            preferred_element_type=f32) + clsb_ref[...])


# ------------------------------ parameter init ---------------------------------
def init_params(key):
    keys = iter(jax.random.split(key, 64))

    def dense(shape, scale=0.02):
        return jax.random.normal(next(keys), shape, jnp.float32) * scale

    wqkv, bqkv, wo, w1, b1, w2, vecs = [], [], [], [], [], [], []
    for _ in range(NUM_LAYERS):
        wqkv.append(dense((H, 3 * H)))                       # fused Wq|Wk|Wv
        bqkv.append(jnp.zeros((1, 3 * H), jnp.float32))
        wo.append(dense((NUM_HEADS, HEAD_DIM, H)))           # Wo split per head
        w1.append(dense((H, FFN)))
        b1.append(jnp.zeros((1, FFN), jnp.float32))
        w2.append(dense((FFN, H)))
        vecs.append(jnp.stack([
            jnp.zeros((H,), jnp.float32),   # bo
            jnp.ones((H,), jnp.float32),    # ln1 gamma
            jnp.zeros((H,), jnp.float32),   # ln1 beta
            jnp.zeros((H,), jnp.float32),   # b2
            jnp.ones((H,), jnp.float32),    # ln2 gamma
            jnp.zeros((H,), jnp.float32),   # ln2 beta
        ]))

    cls_w = dense((H, NUM_CLASSES))
    cls_w_pad = jnp.zeros((H, NC_PAD), jnp.float32).at[:, :NUM_CLASSES].set(cls_w)
    cls_b_pad = jnp.zeros((1, NC_PAD), jnp.float32)

    return {
        "word_emb": dense((VOCAB, H)),
        "pos_emb": dense((MAX_POS, H)),
        # TODO(synk): HF RoBERTa offsets positions by padding_idx+1; plain arange here.
        "type_emb": dense((1, H)),
        "emb_ln": jnp.concatenate([jnp.ones((1, H), jnp.float32),
                                   jnp.zeros((1, H), jnp.float32)], axis=0),
        "wqkv": jnp.stack(wqkv), "bqkv": jnp.stack(bqkv), "wo": jnp.stack(wo),
        "w1": jnp.stack(w1), "b1": jnp.stack(b1), "w2": jnp.stack(w2),
        "vecs": jnp.stack(vecs),
        "cls_w_pad": cls_w_pad, "cls_b_pad": cls_b_pad,
    }


# --------------------------------- forward -------------------------------------
def roberta_classifier_forward(input_ids, attention_mask, params):
    # plain-JAX glue: reshape ids to rows, build pos/type embedding rows and the
    # (BS, BS) additive attention bias (block-diagonal over batch + key padding).
    ids2d = input_ids.reshape(BS, 1).astype(jnp.int32)               # (BS, 1)
    fixed_emb = jnp.tile(params["pos_emb"], (B, 1)) + params["type_emb"]  # (BS, H)

    keep = attention_mask.reshape(BS).astype(jnp.float32)            # (BS,)
    batch_id = jnp.arange(BS) // S
    same_batch = batch_id[:, None] == batch_id[None, :]
    bias = jnp.where(same_batch & (keep[None, :] > 0.5),
                     0.0, -1e9).astype(jnp.float32)                  # (BS, BS)

    logits_pad = pl.pallas_call(
        fused_forward_kernel,
        out_shape=jax.ShapeDtypeStruct((B, NC_PAD), jnp.float32),
        # grid-less single step: everything (weights + activations) lives in VMEM
    )(ids2d, bias, params["word_emb"], fixed_emb, params["emb_ln"],
      params["wqkv"], params["bqkv"], params["wo"], params["w1"],
      params["b1"], params["w2"], params["vecs"],
      params["cls_w_pad"], params["cls_b_pad"])

    return logits_pad[:, :NUM_CLASSES]


# ----------------------------------- main ---------------------------------------
if __name__ == "__main__":
    key = jax.random.PRNGKey(0)
    pkey, ikey = jax.random.split(key)

    params = init_params(pkey)
    input_ids = jax.random.randint(ikey, (B, S), 0, VOCAB, dtype=jnp.int32)
    attention_mask = jnp.ones((B, S), dtype=jnp.int32)

    logits = roberta_classifier_forward(input_ids, attention_mask, params)
    logits = jax.block_until_ready(logits)

    assert logits.shape == (B, NUM_CLASSES), logits.shape
    assert bool(jnp.all(jnp.isfinite(logits)))
    print("KERNEL_OK")
</pallas_src>

<mosaic_0001>
module attributes {stable_mosaic.version = 11 : i64} {
  func.func @fused_forward_kernel(%arg0: memref<16x1xi32, #tpu.memory_space<vmem>>, %arg1: memref<16x16xf32, #tpu.memory_space<vmem>>, %arg2: memref<50x32xf32, #tpu.memory_space<vmem>>, %arg3: memref<16x32xf32, #tpu.memory_space<vmem>>, %arg4: memref<2x32xf32, #tpu.memory_space<vmem>>, %arg5: memref<2x32x96xf32, #tpu.memory_space<vmem>>, %arg6: memref<2x1x96xf32, #tpu.memory_space<vmem>>, %arg7: memref<2x2x16x32xf32, #tpu.memory_space<vmem>>, %arg8: memref<2x32x64xf32, #tpu.memory_space<vmem>>, %arg9: memref<2x1x64xf32, #tpu.memory_space<vmem>>, %arg10: memref<2x64x32xf32, #tpu.memory_space<vmem>>, %arg11: memref<2x6x32xf32, #tpu.memory_space<vmem>>, %arg12: memref<32x128xf32, #tpu.memory_space<vmem>>, %arg13: memref<1x128xf32, #tpu.memory_space<vmem>>, %arg14: memref<2x128xf32, #tpu.memory_space<vmem>>) attributes {dimension_semantics = [], scalar_prefetch = 0 : i64, scratch_operands = 0 : i64, tpu.core_type = #tpu.core_type<tc>} {
    %c0 = arith.constant 0 : index
    %c0_0 = arith.constant 0 : index
    %0 = vector.load %arg0[%c0, %c0_0] : memref<16x1xi32, #tpu.memory_space<vmem>>, vector<16x1xi32>
    %1 = tpu.iota {dimensions = array<i32: 1>} : vector<16x50xi32>
    %2 = vector.broadcast %0 : vector<16x1xi32> to vector<16x50xi32>
    %3 = arith.cmpi eq, %1, %2 : vector<16x50xi32>
    %4 = arith.extui %3 : vector<16x50xi1> to vector<16x50xi32>
    %5 = arith.sitofp %4 : vector<16x50xi32> to vector<16x50xf32>
    %c0_1 = arith.constant 0 : index
    %c0_2 = arith.constant 0 : index
    %6 = vector.load %arg2[%c0_1, %c0_2] : memref<50x32xf32, #tpu.memory_space<vmem>>, vector<50x32xf32>
    %cst = arith.constant dense<0.000000e+00> : vector<16x32xf32>
    %7 = tpu.matmul %5, %6, %cst {dimension_numbers = #tpu.dot_dimension_numbers<[1], [0], [0], [1], [0, 0, 1, 1], [], []>} : vector<16x50xf32>, vector<50x32xf32>, vector<16x32xf32> -> vector<16x32xf32>
    %c0_3 = arith.constant 0 : index
    %c0_4 = arith.constant 0 : index
    %8 = vector.load %arg3[%c0_3, %c0_4] : memref<16x32xf32, #tpu.memory_space<vmem>>, vector<16x32xf32>
    %9 = arith.addf %7, %8 : vector<16x32xf32>
    %c0_5 = arith.constant 0 : index
    %c0_6 = arith.constant 0 : index
    %10 = vector.load %arg4[%c0_5, %c0_6] : memref<2x32xf32, #tpu.memory_space<vmem>>, vector<1x32xf32>
    %c1 = arith.constant 1 : index
    %c0_7 = arith.constant 0 : index
    %11 = vector.load %arg4[%c1, %c0_7] : memref<2x32xf32, #tpu.memory_space<vmem>>, vector<1x32xf32>
    %cst_8 = arith.constant dense<0.000000e+00> : vector<16xf32>
    %12 = vector.multi_reduction <add>, %9, %cst_8 [1] : vector<16x32xf32> to vector<16xf32>
    %13 = vector.shape_cast %12 : vector<16xf32> to vector<16x1xf32>
    %cst_9 = arith.constant 3.200000e+01 : f32
    %14 = vector.broadcast %cst_9 : f32 to vector<16x1xf32>
    %15 = arith.divf %13, %14 : vector<16x1xf32>
    %16 = vector.broadcast %15 : vector<16x1xf32> to vector<16x32xf32>
    %17 = arith.subf %9, %16 : vector<16x32xf32>
    %18 = arith.mulf %17, %17 : vector<16x32xf32>
    %cst_10 = arith.constant dense<0.000000e+00> : vector<16xf32>
    %19 = vector.multi_reduction <add>, %18, %cst_10 [1] : vector<16x32xf32> to vector<16xf32>
    %20 = vector.shape_cast %19 : vector<16xf32> to vector<16x1xf32>
    %cst_11 = arith.constant 3.200000e+01 : f32
    %21 = vector.broadcast %cst_11 : f32 to vector<16x1xf32>
    %22 = arith.divf %20, %21 : vector<16x1xf32>
    %cst_12 = arith.constant 9.99999974E-6 : f32
    %23 = vector.broadcast %cst_12 : f32 to vector<16x1xf32>
    %24 = arith.addf %22, %23 : vector<16x1xf32>
    %25 = math.rsqrt %24 : vector<16x1xf32>
    %26 = vector.broadcast %15 : vector<16x1xf32> to vector<16x32xf32>
    %27 = arith.subf %9, %26 : vector<16x32xf32>
    %28 = vector.broadcast %25 : vector<16x1xf32> to vector<16x32xf32>
    %29 = arith.mulf %27, %28 : vector<16x32xf32>
    %30 = vector.broadcast %10 : vector<1x32xf32> to vector<16x32xf32>
    %31 = arith.mulf %29, %30 : vector<16x32xf32>
    %32 = vector.broadcast %11 : vector<1x32xf32> to vector<16x32xf32>
    %33 = arith.addf %31, %32 : vector<16x32xf32>
    %c0_13 = arith.constant 0 : index
    %c0_14 = arith.constant 0 : index
    %34 = vector.load %arg1[%c0_13, %c0_14] : memref<16x16xf32, #tpu.memory_space<vmem>>, vector<16x16xf32>
    %c0_15 = arith.constant 0 : index
    %c0_16 = arith.constant 0 : index
    %c0_17 = arith.constant 0 : index
    %35 = vector.load %arg11[%c0_15, %c0_16, %c0_17] : memref<2x6x32xf32, #tpu.memory_space<vmem>>, vector<1x6x32xf32>
    %36 = vector.shape_cast %35 : vector<1x6x32xf32> to vector<6x32xf32>
    %c0_18 = arith.constant 0 : index
    %c0_19 = arith.constant 0 : index
    %c0_20 = arith.constant 0 : index
    %37 = vector.load %arg5[%c0_18, %c0_19, %c0_20] : memref<2x32x96xf32, #tpu.memory_space<vmem>>, vector<1x32x96xf32>
    %38 = vector.shape_cast %37 : vector<1x32x96xf32> to vector<32x96xf32>
    %cst_21 = arith.constant dense<0.000000e+00> : vector<16x96xf32>
    %39 = tpu.matmul %33, %38, %cst_21 {dimension_numbers = #tpu.dot_dimension_numbers<[1], [0], [0], [1], [0, 0, 1, 1], [], []>} : vector<16x32xf32>, vector<32x96xf32>, vector<16x96xf32> -> vector<16x96xf32>
    %c0_22 = arith.constant 0 : index
    %c0_23 = arith.constant 0 : index
    %c0_24 = arith.constant 0 : index
    %40 = vector.load %arg6[%c0_22, %c0_23, %c0_24] : memref<2x1x96xf32, #tpu.memory_space<vmem>>, vector<1x1x96xf32>
    %41 = vector.shape_cast %40 : vector<1x1x96xf32> to vector<1x96xf32>
    %42 = vector.broadcast %41 : vector<1x96xf32> to vector<16x96xf32>
    %43 = arith.addf %39, %42 : vector<16x96xf32>
    %cst_25 = arith.constant 0.000000e+00 : f32
    %44 = vector.broadcast %cst_25 : f32 to vector<16x32xf32>
    %45 = vector.extract_strided_slice %43 {offsets = [0, 0], sizes = [16, 16], strides = [1, 1]} : vector<16x96xf32> to vector<16x16xf32>
    %46 = vector.extract_strided_slice %43 {offsets = [0, 32], sizes = [16, 16], strides = [1, 1]} : vector<16x96xf32> to vector<16x16xf32>
    %47 = vector.extract_strided_slice %43 {offsets = [0, 64], sizes = [16, 16], strides = [1, 1]} : vector<16x96xf32> to vector<16x16xf32>
    %cst_26 = arith.constant dense<0.000000e+00> : vector<16x16xf32>
    %48 = tpu.matmul %45, %46, %cst_26 {dimension_numbers = #tpu.dot_dimension_numbers<[1], [1], [0], [0], [0, 0, 1, 0], [], []>} : vector<16x16xf32>, vector<16x16xf32>, vector<16x16xf32> -> vector<16x16xf32>
    %cst_27 = arith.constant 2.500000e-01 : f32
    %49 = vector.broadcast %cst_27 : f32 to vector<16x16xf32>
    %50 = arith.mulf %48, %49 : vector<16x16xf32>
    %51 = arith.addf %50, %34 : vector<16x16xf32>
    %cst_28 = arith.constant dense<0xFF800000> : vector<16xf32>
    %52 = vector.multi_reduction <maximumf>, %51, %cst_28 [1] : vector<16x16xf32> to vector<16xf32>
    %53 = vector.shape_cast %52 : vector<16xf32> to vector<16x1xf32>
    %54 = vector.broadcast %53 : vector<16x1xf32> to vector<16x16xf32>
    %55 = arith.subf %51, %54 : vector<16x16xf32>
    %56 = math.exp %55 : vector<16x16xf32>
    %cst_29 = arith.constant dense<0.000000e+00> : vector<16xf32>
    %57 = vector.multi_reduction <add>, %56, %cst_29 [1] : vector<16x16xf32> to vector<16xf32>
    %58 = vector.shape_cast %57 : vector<16xf32> to vector<16x1xf32>
    %59 = tpu.reciprocal %58 {approx = true} : vector<16x1xf32> -> vector<16x1xf32>
    %60 = vector.broadcast %59 : vector<16x1xf32> to vector<16x16xf32>
    %61 = arith.mulf %56, %60 : vector<16x16xf32>
    %cst_30 = arith.constant dense<0.000000e+00> : vector<16x16xf32>
    %62 = tpu.matmul %61, %47, %cst_30 {dimension_numbers = #tpu.dot_dimension_numbers<[1], [0], [0], [1], [0, 0, 1, 1], [], []>} : vector<16x16xf32>, vector<16x16xf32>, vector<16x16xf32> -> vector<16x16xf32>
    %c0_31 = arith.constant 0 : index
    %c0_32 = arith.constant 0 : index
    %c0_33 = arith.constant 0 : index
    %c0_34 = arith.constant 0 : index
    %63 = vector.load %arg7[%c0_31, %c0_32, %c0_33, %c0_34] : memref<2x2x16x32xf32, #tpu.memory_space<vmem>>, vector<1x1x16x32xf32>
    %64 = vector.shape_cast %63 : vector<1x1x16x32xf32> to vector<16x32xf32>
    %cst_35 = arith.constant dense<0.000000e+00> : vector<16x32xf32>
    %65 = tpu.matmul %62, %64, %cst_35 {dimension_numbers = #tpu.dot_dimension_numbers<[1], [0], [0], [1], [0, 0, 1, 1], [], []>} : vector<16x16xf32>, vector<16x32xf32>, vector<16x32xf32> -> vector<16x32xf32>
    %66 = arith.addf %44, %65 : vector<16x32xf32>
    %67 = vector.extract_strided_slice %43 {offsets = [0, 16], sizes = [16, 16], strides = [1, 1]} : vector<16x96xf32> to vector<16x16xf32>
    %68 = vector.extract_strided_slice %43 {offsets = [0, 48], sizes = [16, 16], strides = [1, 1]} : vector<16x96xf32> to vector<16x16xf32>
    %69 = vector.extract_strided_slice %43 {offsets = [0, 80], sizes = [16, 16], strides = [1, 1]} : vector<16x96xf32> to vector<16x16xf32>
    %cst_36 = arith.constant dense<0.000000e+00> : vector<16x16xf32>
    %70 = tpu.matmul %67, %68, %cst_36 {dimension_numbers = #tpu.dot_dimension_numbers<[1], [1], [0], [0], [0, 0, 1, 0], [], []>} : vector<16x16xf32>, vector<16x16xf32>, vector<16x16xf32> -> vector<16x16xf32>
    %cst_37 = arith.constant 2.500000e-01 : f32
    %71 = vector.broadcast %cst_37 : f32 to vector<16x16xf32>
    %72 = arith.mulf %70, %71 : vector<16x16xf32>
    %73 = arith.addf %72, %34 : vector<16x16xf32>
    %cst_38 = arith.constant dense<0xFF800000> : vector<16xf32>
    %74 = vector.multi_reduction <maximumf>, %73, %cst_38 [1] : vector<16x16xf32> to vector<16xf32>
    %75 = vector.shape_cast %74 : vector<16xf32> to vector<16x1xf32>
    %76 = vector.broadcast %75 : vector<16x1xf32> to vector<16x16xf32>
    %77 = arith.subf %73, %76 : vector<16x16xf32>
    %78 = math.exp %77 : vector<16x16xf32>
    %cst_39 = arith.constant dense<0.000000e+00> : vector<16xf32>
    %79 = vector.multi_reduction <add>, %78, %cst_39 [1] : vector<16x16xf32> to vector<16xf32>
    %80 = vector.shape_cast %79 : vector<16xf32> to vector<16x1xf32>
    %81 = tpu.reciprocal %80 {approx = true} : vector<16x1xf32> -> vector<16x1xf32>
    %82 = vector.broadcast %81 : vector<16x1xf32> to vector<16x16xf32>
    %83 = arith.mulf %78, %82 : vector<16x16xf32>
    %cst_40 = arith.constant dense<0.000000e+00> : vector<16x16xf32>
    %84 = tpu.matmul %83, %69, %cst_40 {dimension_numbers = #tpu.dot_dimension_numbers<[1], [0], [0], [1], [0, 0, 1, 1], [], []>} : vector<16x16xf32>, vector<16x16xf32>, vector<16x16xf32> -> vector<16x16xf32>
    %c0_41 = arith.constant 0 : index
    %c1_42 = arith.constant 1 : index
    %c0_43 = arith.constant 0 : index
    %c0_44 = arith.constant 0 : index
    %85 = vector.load %arg7[%c0_41, %c1_42, %c0_43, %c0_44] : memref<2x2x16x32xf32, #tpu.memory_space<vmem>>, vector<1x1x16x32xf32>
    %86 = vector.shape_cast %85 : vector<1x1x16x32xf32> to vector<16x32xf32>
    %cst_45 = arith.constant dense<0.000000e+00> : vector<16x32xf32>
    %87 = tpu.matmul %84, %86, %cst_45 {dimension_numbers = #tpu.dot_dimension_numbers<[1], [0], [0], [1], [0, 0, 1, 1], [], []>} : vector<16x16xf32>, vector<16x32xf32>, vector<16x32xf32> -> vector<16x32xf32>
    %88 = arith.addf %66, %87 : vector<16x32xf32>
    %89 = vector.extract_strided_slice %36 {offsets = [0, 0], sizes = [1, 32], strides = [1, 1]} : vector<6x32xf32> to vector<1x32xf32>
    %90 = vector.broadcast %89 : vector<1x32xf32> to vector<16x32xf32>
    %91 = arith.addf %88, %90 : vector<16x32xf32>
    %92 = arith.addf %33, %91 : vector<16x32xf32>
    %93 = vector.extract_strided_slice %36 {offsets = [1, 0], sizes = [1, 32], strides = [1, 1]} : vector<6x32xf32> to vector<1x32xf32>
    %94 = vector.extract_strided_slice %36 {offsets = [2, 0], sizes = [1, 32], strides = [1, 1]} : vector<6x32xf32> to vector<1x32xf32>
    %cst_46 = arith.constant dense<0.000000e+00> : vector<16xf32>
    %95 = vector.multi_reduction <add>, %92, %cst_46 [1] : vector<16x32xf32> to vector<16xf32>
    %96 = vector.shape_cast %95 : vector<16xf32> to vector<16x1xf32>
    %cst_47 = arith.constant 3.200000e+01 : f32
    %97 = vector.broadcast %cst_47 : f32 to vector<16x1xf32>
    %98 = arith.divf %96, %97 : vector<16x1xf32>
    %99 = vector.broadcast %98 : vector<16x1xf32> to vector<16x32xf32>
    %100 = arith.subf %92, %99 : vector<16x32xf32>
    %101 = arith.mulf %100, %100 : vector<16x32xf32>
    %cst_48 = arith.constant dense<0.000000e+00> : vector<16xf32>
    %102 = vector.multi_reduction <add>, %101, %cst_48 [1] : vector<16x32xf32> to vector<16xf32>
    %103 = vector.shape_cast %102 : vector<16xf32> to vector<16x1xf32>
    %cst_49 = arith.constant 3.200000e+01 : f32
    %104 = vector.broadcast %cst_49 : f32 to vector<16x1xf32>
    %105 = arith.divf %103, %104 : vector<16x1xf32>
    %cst_50 = arith.constant 9.99999974E-6 : f32
    %106 = vector.broadcast %cst_50 : f32 to vector<16x1xf32>
    %107 = arith.addf %105, %106 : vector<16x1xf32>
    %108 = math.rsqrt %107 : vector<16x1xf32>
    %109 = vector.broadcast %98 : vector<16x1xf32> to vector<16x32xf32>
    %110 = arith.subf %92, %109 : vector<16x32xf32>
    %111 = vector.broadcast %108 : vector<16x1xf32> to vector<16x32xf32>
    %112 = arith.mulf %110, %111 : vector<16x32xf32>
    %113 = vector.broadcast %93 : vector<1x32xf32> to vector<16x32xf32>
    %114 = arith.mulf %112, %113 : vector<16x32xf32>
    %115 = vector.broadcast %94 : vector<1x32xf32> to vector<16x32xf32>
    %116 = arith.addf %114, %115 : vector<16x32xf32>
    %c0_51 = arith.constant 0 : index
    %c0_52 = arith.constant 0 : index
    %c0_53 = arith.constant 0 : index
    %117 = vector.load %arg8[%c0_51, %c0_52, %c0_53] : memref<2x32x64xf32, #tpu.memory_space<vmem>>, vector<1x32x64xf32>
    %118 = vector.shape_cast %117 : vector<1x32x64xf32> to vector<32x64xf32>
    %cst_54 = arith.constant dense<0.000000e+00> : vector<16x64xf32>
    %119 = tpu.matmul %116, %118, %cst_54 {dimension_numbers = #tpu.dot_dimension_numbers<[1], [0], [0], [1], [0, 0, 1, 1], [], []>} : vector<16x32xf32>, vector<32x64xf32>, vector<16x64xf32> -> vector<16x64xf32>
    %c0_55 = arith.constant 0 : index
    %c0_56 = arith.constant 0 : index
    %c0_57 = arith.constant 0 : index
    %120 = vector.load %arg9[%c0_55, %c0_56, %c0_57] : memref<2x1x64xf32, #tpu.memory_space<vmem>>, vector<1x1x64xf32>
    %121 = vector.shape_cast %120 : vector<1x1x64xf32> to vector<1x64xf32>
    %122 = vector.broadcast %121 : vector<1x64xf32> to vector<16x64xf32>
    %123 = arith.addf %119, %122 : vector<16x64xf32>
    %cst_58 = arith.constant 5.000000e-01 : f32
    %124 = vector.broadcast %cst_58 : f32 to vector<16x64xf32>
    %125 = arith.mulf %124, %123 : vector<16x64xf32>
    %cst_59 = arith.constant 4.471500e-02 : f32
    %126 = vector.broadcast %cst_59 : f32 to vector<16x64xf32>
    %127 = arith.mulf %126, %123 : vector<16x64xf32>
    %128 = arith.mulf %127, %123 : vector<16x64xf32>
    %129 = arith.mulf %128, %123 : vector<16x64xf32>
    %130 = arith.addf %123, %129 : vector<16x64xf32>
    %cst_60 = arith.constant 0.797884583 : f32
    %131 = vector.broadcast %cst_60 : f32 to vector<16x64xf32>
    %132 = arith.mulf %131, %130 : vector<16x64xf32>
    %133 = math.tanh %132 : vector<16x64xf32>
    %cst_61 = arith.constant 1.000000e+00 : f32
    %134 = vector.broadcast %cst_61 : f32 to vector<16x64xf32>
    %135 = arith.addf %134, %133 : vector<16x64xf32>
    %136 = arith.mulf %125, %135 : vector<16x64xf32>
    %c0_62 = arith.constant 0 : index
    %c0_63 = arith.constant 0 : index
    %c0_64 = arith.constant 0 : index
    %137 = vector.load %arg10[%c0_62, %c0_63, %c0_64] : memref<2x64x32xf32, #tpu.memory_space<vmem>>, vector<1x64x32xf32>
    %138 = vector.shape_cast %137 : vector<1x64x32xf32> to vector<64x32xf32>
    %cst_65 = arith.constant dense<0.000000e+00> : vector<16x32xf32>
    %139 = tpu.matmul %136, %138, %cst_65 {dimension_numbers = #tpu.dot_dimension_numbers<[1], [0], [0], [1], [0, 0, 1, 1], [], []>} : vector<16x64xf32>, vector<64x32xf32>, vector<16x32xf32> -> vector<16x32xf32>
    %140 = vector.extract_strided_slice %36 {offsets = [3, 0], sizes = [1, 32], strides = [1, 1]} : vector<6x32xf32> to vector<1x32xf32>
    %141 = vector.broadcast %140 : vector<1x32xf32> to vector<16x32xf32>
    %142 = arith.addf %139, %141 : vector<16x32xf32>
    %143 = arith.addf %116, %142 : vector<16x32xf32>
    %144 = vector.extract_strided_slice %36 {offsets = [4, 0], sizes = [1, 32], strides = [1, 1]} : vector<6x32xf32> to vector<1x32xf32>
    %145 = vector.extract_strided_slice %36 {offsets = [5, 0], sizes = [1, 32], strides = [1, 1]} : vector<6x32xf32> to vector<1x32xf32>
    %cst_66 = arith.constant dense<0.000000e+00> : vector<16xf32>
    %146 = vector.multi_reduction <add>, %143, %cst_66 [1] : vector<16x32xf32> to vector<16xf32>
    %147 = vector.shape_cast %146 : vector<16xf32> to vector<16x1xf32>
    %cst_67 = arith.constant 3.200000e+01 : f32
    %148 = vector.broadcast %cst_67 : f32 to vector<16x1xf32>
    %149 = arith.divf %147, %148 : vector<16x1xf32>
    %150 = vector.broadcast %149 : vector<16x1xf32> to vector<16x32xf32>
    %151 = arith.subf %143, %150 : vector<16x32xf32>
    %152 = arith.mulf %151, %151 : vector<16x32xf32>
    %cst_68 = arith.constant dense<0.000000e+00> : vector<16xf32>
    %153 = vector.multi_reduction <add>, %152, %cst_68 [1] : vector<16x32xf32> to vector<16xf32>
    %154 = vector.shape_cast %153 : vector<16xf32> to vector<16x1xf32>
    %cst_69 = arith.constant 3.200000e+01 : f32
    %155 = vector.broadcast %cst_69 : f32 to vector<16x1xf32>
    %156 = arith.divf %154, %155 : vector<16x1xf32>
    %cst_70 = arith.constant 9.99999974E-6 : f32
    %157 = vector.broadcast %cst_70 : f32 to vector<16x1xf32>
    %158 = arith.addf %156, %157 : vector<16x1xf32>
    %159 = math.rsqrt %158 : vector<16x1xf32>
    %160 = vector.broadcast %149 : vector<16x1xf32> to vector<16x32xf32>
    %161 = arith.subf %143, %160 : vector<16x32xf32>
    %162 = vector.broadcast %159 : vector<16x1xf32> to vector<16x32xf32>
    %163 = arith.mulf %161, %162 : vector<16x32xf32>
    %164 = vector.broadcast %144 : vector<1x32xf32> to vector<16x32xf32>
    %165 = arith.mulf %163, %164 : vector<16x32xf32>
    %166 = vector.broadcast %145 : vector<1x32xf32> to vector<16x32xf32>
    %167 = arith.addf %165, %166 : vector<16x32xf32>
    %c1_71 = arith.constant 1 : index
    %c0_72 = arith.constant 0 : index
    %c0_73 = arith.constant 0 : index
    %168 = vector.load %arg11[%c1_71, %c0_72, %c0_73] : memref<2x6x32xf32, #tpu.memory_space<vmem>>, vector<1x6x32xf32>
    %169 = vector.shape_cast %168 : vector<1x6x32xf32> to vector<6x32xf32>
    %c1_74 = arith.constant 1 : index
    %c0_75 = arith.constant 0 : index
    %c0_76 = arith.constant 0 : index
    %170 = vector.load %arg5[%c1_74, %c0_75, %c0_76] : memref<2x32x96xf32, #tpu.memory_space<vmem>>, vector<1x32x96xf32>
    %171 = vector.shape_cast %170 : vector<1x32x96xf32> to vector<32x96xf32>
    %cst_77 = arith.constant dense<0.000000e+00> : vector<16x96xf32>
    %172 = tpu.matmul %167, %171, %cst_77 {dimension_numbers = #tpu.dot_dimension_numbers<[1], [0], [0], [1], [0, 0, 1, 1], [], []>} : vector<16x32xf32>, vector<32x96xf32>, vector<16x96xf32> -> vector<16x96xf32>
    %c1_78 = arith.constant 1 : index
    %c0_79 = arith.constant 0 : index
    %c0_80 = arith.constant 0 : index
    %173 = vector.load %arg6[%c1_78, %c0_79, %c0_80] : memref<2x1x96xf32, #tpu.memory_space<vmem>>, vector<1x1x96xf32>
    %174 = vector.shape_cast %173 : vector<1x1x96xf32> to vector<1x96xf32>
    %175 = vector.broadcast %174 : vector<1x96xf32> to vector<16x96xf32>
    %176 = arith.addf %172, %175 : vector<16x96xf32>
    %cst_81 = arith.constant 0.000000e+00 : f32
    %177 = vector.broadcast %cst_81 : f32 to vector<16x32xf32>
    %178 = vector.extract_strided_slice %176 {offsets = [0, 0], sizes = [16, 16], strides = [1, 1]} : vector<16x96xf32> to vector<16x16xf32>
    %179 = vector.extract_strided_slice %176 {offsets = [0, 32], sizes = [16, 16], strides = [1, 1]} : vector<16x96xf32> to vector<16x16xf32>
    %180 = vector.extract_strided_slice %176 {offsets = [0, 64], sizes = [16, 16], strides = [1, 1]} : vector<16x96xf32> to vector<16x16xf32>
    %cst_82 = arith.constant dense<0.000000e+00> : vector<16x16xf32>
    %181 = tpu.matmul %178, %179, %cst_82 {dimension_numbers = #tpu.dot_dimension_numbers<[1], [1], [0], [0], [0, 0, 1, 0], [], []>} : vector<16x16xf32>, vector<16x16xf32>, vector<16x16xf32> -> vector<16x16xf32>
    %cst_83 = arith.constant 2.500000e-01 : f32
    %182 = vector.broadcast %cst_83 : f32 to vector<16x16xf32>
    %183 = arith.mulf %181, %182 : vector<16x16xf32>
    %184 = arith.addf %183, %34 : vector<16x16xf32>
    %cst_84 = arith.constant dense<0xFF800000> : vector<16xf32>
    %185 = vector.multi_reduction <maximumf>, %184, %cst_84 [1] : vector<16x16xf32> to vector<16xf32>
    %186 = vector.shape_cast %185 : vector<16xf32> to vector<16x1xf32>
    %187 = vector.broadcast %186 : vector<16x1xf32> to vector<16x16xf32>
    %188 = arith.subf %184, %187 : vector<16x16xf32>
    %189 = math.exp %188 : vector<16x16xf32>
    %cst_85 = arith.constant dense<0.000000e+00> : vector<16xf32>
    %190 = vector.multi_reduction <add>, %189, %cst_85 [1] : vector<16x16xf32> to vector<16xf32>
    %191 = vector.shape_cast %190 : vector<16xf32> to vector<16x1xf32>
    %192 = tpu.reciprocal %191 {approx = true} : vector<16x1xf32> -> vector<16x1xf32>
    %193 = vector.broadcast %192 : vector<16x1xf32> to vector<16x16xf32>
    %194 = arith.mulf %189, %193 : vector<16x16xf32>
    %cst_86 = arith.constant dense<0.000000e+00> : vector<16x16xf32>
    %195 = tpu.matmul %194, %180, %cst_86 {dimension_numbers = #tpu.dot_dimension_numbers<[1], [0], [0], [1], [0, 0, 1, 1], [], []>} : vector<16x16xf32>, vector<16x16xf32>, vector<16x16xf32> -> vector<16x16xf32>
    %c1_87 = arith.constant 1 : index
    %c0_88 = arith.constant 0 : index
    %c0_89 = arith.constant 0 : index
    %c0_90 = arith.constant 0 : index
    %196 = vector.load %arg7[%c1_87, %c0_88, %c0_89, %c0_90] : memref<2x2x16x32xf32, #tpu.memory_space<vmem>>, vector<1x1x16x32xf32>
    %197 = vector.shape_cast %196 : vector<1x1x16x32xf32> to vector<16x32xf32>
    %cst_91 = arith.constant dense<0.000000e+00> : vector<16x32xf32>
    %198 = tpu.matmul %195, %197, %cst_91 {dimension_numbers = #tpu.dot_dimension_numbers<[1], [0], [0], [1], [0, 0, 1, 1], [], []>} : vector<16x16xf32>, vector<16x32xf32>, vector<16x32xf32> -> vector<16x32xf32>
    %199 = arith.addf %177, %198 : vector<16x32xf32>
    %200 = vector.extract_strided_slice %176 {offsets = [0, 16], sizes = [16, 16], strides = [1, 1]} : vector<16x96xf32> to vector<16x16xf32>
    %201 = vector.extract_strided_slice %176 {offsets = [0, 48], sizes = [16, 16], strides = [1, 1]} : vector<16x96xf32> to vector<16x16xf32>
    %202 = vector.extract_strided_slice %176 {offsets = [0, 80], sizes = [16, 16], strides = [1, 1]} : vector<16x96xf32> to vector<16x16xf32>
    %cst_92 = arith.constant dense<0.000000e+00> : vector<16x16xf32>
    %203 = tpu.matmul %200, %201, %cst_92 {dimension_numbers = #tpu.dot_dimension_numbers<[1], [1], [0], [0], [0, 0, 1, 0], [], []>} : vector<16x16xf32>, vector<16x16xf32>, vector<16x16xf32> -> vector<16x16xf32>
    %cst_93 = arith.constant 2.500000e-01 : f32
    %204 = vector.broadcast %cst_93 : f32 to vector<16x16xf32>
    %205 = arith.mulf %203, %204 : vector<16x16xf32>
    %206 = arith.addf %205, %34 : vector<16x16xf32>
    %cst_94 = arith.constant dense<0xFF800000> : vector<16xf32>
    %207 = vector.multi_reduction <maximumf>, %206, %cst_94 [1] : vector<16x16xf32> to vector<16xf32>
    %208 = vector.shape_cast %207 : vector<16xf32> to vector<16x1xf32>
    %209 = vector.broadcast %208 : vector<16x1xf32> to vector<16x16xf32>
    %210 = arith.subf %206, %209 : vector<16x16xf32>
    %211 = math.exp %210 : vector<16x16xf32>
    %cst_95 = arith.constant dense<0.000000e+00> : vector<16xf32>
    %212 = vector.multi_reduction <add>, %211, %cst_95 [1] : vector<16x16xf32> to vector<16xf32>
    %213 = vector.shape_cast %212 : vector<16xf32> to vector<16x1xf32>
    %214 = tpu.reciprocal %213 {approx = true} : vector<16x1xf32> -> vector<16x1xf32>
    %215 = vector.broadcast %214 : vector<16x1xf32> to vector<16x16xf32>
    %216 = arith.mulf %211, %215 : vector<16x16xf32>
    %cst_96 = arith.constant dense<0.000000e+00> : vector<16x16xf32>
    %217 = tpu.matmul %216, %202, %cst_96 {dimension_numbers = #tpu.dot_dimension_numbers<[1], [0], [0], [1], [0, 0, 1, 1], [], []>} : vector<16x16xf32>, vector<16x16xf32>, vector<16x16xf32> -> vector<16x16xf32>
    %c1_97 = arith.constant 1 : index
    %c1_98 = arith.constant 1 : index
    %c0_99 = arith.constant 0 : index
    %c0_100 = arith.constant 0 : index
    %218 = vector.load %arg7[%c1_97, %c1_98, %c0_99, %c0_100] : memref<2x2x16x32xf32, #tpu.memory_space<vmem>>, vector<1x1x16x32xf32>
    %219 = vector.shape_cast %218 : vector<1x1x16x32xf32> to vector<16x32xf32>
    %cst_101 = arith.constant dense<0.000000e+00> : vector<16x32xf32>
    %220 = tpu.matmul %217, %219, %cst_101 {dimension_numbers = #tpu.dot_dimension_numbers<[1], [0], [0], [1], [0, 0, 1, 1], [], []>} : vector<16x16xf32>, vector<16x32xf32>, vector<16x32xf32> -> vector<16x32xf32>
    %221 = arith.addf %199, %220 : vector<16x32xf32>
    %222 = vector.extract_strided_slice %169 {offsets = [0, 0], sizes = [1, 32], strides = [1, 1]} : vector<6x32xf32> to vector<1x32xf32>
    %223 = vector.broadcast %222 : vector<1x32xf32> to vector<16x32xf32>
    %224 = arith.addf %221, %223 : vector<16x32xf32>
    %225 = arith.addf %167, %224 : vector<16x32xf32>
    %226 = vector.extract_strided_slice %169 {offsets = [1, 0], sizes = [1, 32], strides = [1, 1]} : vector<6x32xf32> to vector<1x32xf32>
    %227 = vector.extract_strided_slice %169 {offsets = [2, 0], sizes = [1, 32], strides = [1, 1]} : vector<6x32xf32> to vector<1x32xf32>
    %cst_102 = arith.constant dense<0.000000e+00> : vector<16xf32>
    %228 = vector.multi_reduction <add>, %225, %cst_102 [1] : vector<16x32xf32> to vector<16xf32>
    %229 = vector.shape_cast %228 : vector<16xf32> to vector<16x1xf32>
    %cst_103 = arith.constant 3.200000e+01 : f32
    %230 = vector.broadcast %cst_103 : f32 to vector<16x1xf32>
    %231 = arith.divf %229, %230 : vector<16x1xf32>
    %232 = vector.broadcast %231 : vector<16x1xf32> to vector<16x32xf32>
    %233 = arith.subf %225, %232 : vector<16x32xf32>
    %234 = arith.mulf %233, %233 : vector<16x32xf32>
    %cst_104 = arith.constant dense<0.000000e+00> : vector<16xf32>
    %235 = vector.multi_reduction <add>, %234, %cst_104 [1] : vector<16x32xf32> to vector<16xf32>
    %236 = vector.shape_cast %235 : vector<16xf32> to vector<16x1xf32>
    %cst_105 = arith.constant 3.200000e+01 : f32
    %237 = vector.broadcast %cst_105 : f32 to vector<16x1xf32>
    %238 = arith.divf %236, %237 : vector<16x1xf32>
    %cst_106 = arith.constant 9.99999974E-6 : f32
    %239 = vector.broadcast %cst_106 : f32 to vector<16x1xf32>
    %240 = arith.addf %238, %239 : vector<16x1xf32>
    %241 = math.rsqrt %240 : vector<16x1xf32>
    %242 = vector.broadcast %231 : vector<16x1xf32> to vector<16x32xf32>
    %243 = arith.subf %225, %242 : vector<16x32xf32>
    %244 = vector.broadcast %241 : vector<16x1xf32> to vector<16x32xf32>
    %245 = arith.mulf %243, %244 : vector<16x32xf32>
    %246 = vector.broadcast %226 : vector<1x32xf32> to vector<16x32xf32>
    %247 = arith.mulf %245, %246 : vector<16x32xf32>
    %248 = vector.broadcast %227 : vector<1x32xf32> to vector<16x32xf32>
    %249 = arith.addf %247, %248 : vector<16x32xf32>
    %c1_107 = arith.constant 1 : index
    %c0_108 = arith.constant 0 : index
    %c0_109 = arith.constant 0 : index
    %250 = vector.load %arg8[%c1_107, %c0_108, %c0_109] : memref<2x32x64xf32, #tpu.memory_space<vmem>>, vector<1x32x64xf32>
    %251 = vector.shape_cast %250 : vector<1x32x64xf32> to vector<32x64xf32>
    %cst_110 = arith.constant dense<0.000000e+00> : vector<16x64xf32>
    %252 = tpu.matmul %249, %251, %cst_110 {dimension_numbers = #tpu.dot_dimension_numbers<[1], [0], [0], [1], [0, 0, 1, 1], [], []>} : vector<16x32xf32>, vector<32x64xf32>, vector<16x64xf32> -> vector<16x64xf32>
    %c1_111 = arith.constant 1 : index
    %c0_112 = arith.constant 0 : index
    %c0_113 = arith.constant 0 : index
    %253 = vector.load %arg9[%c1_111, %c0_112, %c0_113] : memref<2x1x64xf32, #tpu.memory_space<vmem>>, vector<1x1x64xf32>
    %254 = vector.shape_cast %253 : vector<1x1x64xf32> to vector<1x64xf32>
    %255 = vector.broadcast %254 : vector<1x64xf32> to vector<16x64xf32>
    %256 = arith.addf %252, %255 : vector<16x64xf32>
    %cst_114 = arith.constant 5.000000e-01 : f32
    %257 = vector.broadcast %cst_114 : f32 to vector<16x64xf32>
    %258 = arith.mulf %257, %256 : vector<16x64xf32>
    %cst_115 = arith.constant 4.471500e-02 : f32
    %259 = vector.broadcast %cst_115 : f32 to vector<16x64xf32>
    %260 = arith.mulf %259, %256 : vector<16x64xf32>
    %261 = arith.mulf %260, %256 : vector<16x64xf32>
    %262 = arith.mulf %261, %256 : vector<16x64xf32>
    %263 = arith.addf %256, %262 : vector<16x64xf32>
    %cst_116 = arith.constant 0.797884583 : f32
    %264 = vector.broadcast %cst_116 : f32 to vector<16x64xf32>
    %265 = arith.mulf %264, %263 : vector<16x64xf32>
    %266 = math.tanh %265 : vector<16x64xf32>
    %cst_117 = arith.constant 1.000000e+00 : f32
    %267 = vector.broadcast %cst_117 : f32 to vector<16x64xf32>
    %268 = arith.addf %267, %266 : vector<16x64xf32>
    %269 = arith.mulf %258, %268 : vector<16x64xf32>
    %c1_118 = arith.constant 1 : index
    %c0_119 = arith.constant 0 : index
    %c0_120 = arith.constant 0 : index
    %270 = vector.load %arg10[%c1_118, %c0_119, %c0_120] : memref<2x64x32xf32, #tpu.memory_space<vmem>>, vector<1x64x32xf32>
    %271 = vector.shape_cast %270 : vector<1x64x32xf32> to vector<64x32xf32>
    %cst_121 = arith.constant dense<0.000000e+00> : vector<16x32xf32>
    %272 = tpu.matmul %269, %271, %cst_121 {dimension_numbers = #tpu.dot_dimension_numbers<[1], [0], [0], [1], [0, 0, 1, 1], [], []>} : vector<16x64xf32>, vector<64x32xf32>, vector<16x32xf32> -> vector<16x32xf32>
    %273 = vector.extract_strided_slice %169 {offsets = [3, 0], sizes = [1, 32], strides = [1, 1]} : vector<6x32xf32> to vector<1x32xf32>
    %274 = vector.broadcast %273 : vector<1x32xf32> to vector<16x32xf32>
    %275 = arith.addf %272, %274 : vector<16x32xf32>
    %276 = arith.addf %249, %275 : vector<16x32xf32>
    %277 = vector.extract_strided_slice %169 {offsets = [4, 0], sizes = [1, 32], strides = [1, 1]} : vector<6x32xf32> to vector<1x32xf32>
    %278 = vector.extract_strided_slice %169 {offsets = [5, 0], sizes = [1, 32], strides = [1, 1]} : vector<6x32xf32> to vector<1x32xf32>
    %cst_122 = arith.constant dense<0.000000e+00> : vector<16xf32>
    %279 = vector.multi_reduction <add>, %276, %cst_122 [1] : vector<16x32xf32> to vector<16xf32>
    %280 = vector.shape_cast %279 : vector<16xf32> to vector<16x1xf32>
    %cst_123 = arith.constant 3.200000e+01 : f32
    %281 = vector.broadcast %cst_123 : f32 to vector<16x1xf32>
    %282 = arith.divf %280, %281 : vector<16x1xf32>
    %283 = vector.broadcast %282 : vector<16x1xf32> to vector<16x32xf32>
    %284 = arith.subf %276, %283 : vector<16x32xf32>
    %285 = arith.mulf %284, %284 : vector<16x32xf32>
    %cst_124 = arith.constant dense<0.000000e+00> : vector<16xf32>
    %286 = vector.multi_reduction <add>, %285, %cst_124 [1] : vector<16x32xf32> to vector<16xf32>
    %287 = vector.shape_cast %286 : vector<16xf32> to vector<16x1xf32>
    %cst_125 = arith.constant 3.200000e+01 : f32
    %288 = vector.broadcast %cst_125 : f32 to vector<16x1xf32>
    %289 = arith.divf %287, %288 : vector<16x1xf32>
    %cst_126 = arith.constant 9.99999974E-6 : f32
    %290 = vector.broadcast %cst_126 : f32 to vector<16x1xf32>
    %291 = arith.addf %289, %290 : vector<16x1xf32>
    %292 = math.rsqrt %291 : vector<16x1xf32>
    %293 = vector.broadcast %282 : vector<16x1xf32> to vector<16x32xf32>
    %294 = arith.subf %276, %293 : vector<16x32xf32>
    %295 = vector.broadcast %292 : vector<16x1xf32> to vector<16x32xf32>
    %296 = arith.mulf %294, %295 : vector<16x32xf32>
    %297 = vector.broadcast %277 : vector<1x32xf32> to vector<16x32xf32>
    %298 = arith.mulf %296, %297 : vector<16x32xf32>
    %299 = vector.broadcast %278 : vector<1x32xf32> to vector<16x32xf32>
    %300 = arith.addf %298, %299 : vector<16x32xf32>
    %301 = tpu.iota {dimensions = array<i32: 0>} : vector<2x16xi32>
    %302 = tpu.iota {dimensions = array<i32: 1>} : vector<2x16xi32>
    %c8_i32 = arith.constant 8 : i32
    %303 = vector.broadcast %c8_i32 : i32 to vector<2x16xi32>
    %304 = arith.muli %301, %303 : vector<2x16xi32>
    %305 = arith.cmpi eq, %302, %304 : vector<2x16xi32>
    %306 = arith.extui %305 : vector<2x16xi1> to vector<2x16xi32>
    %307 = arith.sitofp %306 : vector<2x16xi32> to vector<2x16xf32>
    %cst_127 = arith.constant dense<0.000000e+00> : vector<2x32xf32>
    %308 = tpu.matmul %307, %300, %cst_127 {dimension_numbers = #tpu.dot_dimension_numbers<[1], [0], [0], [1], [0, 0, 1, 1], [], []>} : vector<2x16xf32>, vector<16x32xf32>, vector<2x32xf32> -> vector<2x32xf32>
    %c0_128 = arith.constant 0 : index
    %c0_129 = arith.constant 0 : index
    %309 = vector.load %arg12[%c0_128, %c0_129] : memref<32x128xf32, #tpu.memory_space<vmem>>, vector<32x128xf32>
    %cst_130 = arith.constant dense<0.000000e+00> : vector<2x128xf32>
    %310 = tpu.matmul %308, %309, %cst_130 {dimension_numbers = #tpu.dot_dimension_numbers<[1], [0], [0], [1], [0, 0, 1, 1], [], []>} : vector<2x32xf32>, vector<32x128xf32>, vector<2x128xf32> -> vector<2x128xf32>
    %c0_131 = arith.constant 0 : index
    %c0_132 = arith.constant 0 : index
    %311 = vector.load %arg13[%c0_131, %c0_132] : memref<1x128xf32, #tpu.memory_space<vmem>>, vector<1x128xf32>
    %312 = vector.broadcast %311 : vector<1x128xf32> to vector<2x128xf32>
    %313 = arith.addf %310, %312 : vector<2x128xf32>
    %c0_133 = arith.constant 0 : index
    %c0_134 = arith.constant 0 : index
    %314 = vector.load %arg14[%c0_133, %c0_134] : memref<2x128xf32, #tpu.memory_space<vmem>>, vector<2x128xf32>
    tpu.vector_store %arg14[%c0_133, %c0_134], %313 {strides = array<i32>} : memref<2x128xf32, #tpu.memory_space<vmem>>, vector<2x128xf32>,
    return
  }
}

</mosaic_0001>

<llo_original>
// kernel: tpu_custom_call.1
$region0: #{tpu_custom_call.1}
  #allocation0 [shape = 'u32[]', space=smem, size = 0x4, offset = 0x4, fixed_abs, tag = 'smem constant byte address 0x4 - core index']
  #allocation1 [shape = 'u32[144,128]{1,0:T(1,128)}', space=vmem, size = 0x12000, scoped, tag = 'internal scratch']
  %s0 = inlined_call_operand.vmem [shape: s32[16,1], index: 0, kind: input, shape index: {}]
  %s1 = inlined_call_operand.hbm [shape: f32[16,16], index: 1, kind: input, shape index: {}]
  %s2 = inlined_call_operand.vmem [shape: f32[50,32], index: 2, kind: input, shape index: {}]
  %s3 = inlined_call_operand.hbm [shape: f32[16,32], index: 3, kind: input, shape index: {}]
  %s4 = inlined_call_operand.hbm [shape: f32[2,32], index: 4, kind: input, shape index: {}]
  %s5 = inlined_call_operand.vmem [shape: f32[2,32,96], index: 5, kind: input, shape index: {}]
  %s6 = inlined_call_operand.vmem [shape: f32[2,1,96], index: 6, kind: input, shape index: {}]
  %s7 = inlined_call_operand.vmem [shape: f32[2,2,16,32], index: 7, kind: input, shape index: {}]
  %s8 = inlined_call_operand.vmem [shape: f32[2,32,64], index: 8, kind: input, shape index: {}]
  %s9 = inlined_call_operand.vmem [shape: f32[2,1,64], index: 9, kind: input, shape index: {}]
  %s10 = inlined_call_operand.vmem [shape: f32[2,64,32], index: 10, kind: input, shape index: {}]
  %s11 = inlined_call_operand.vmem [shape: f32[2,6,32], index: 11, kind: input, shape index: {}]
  %s12 = inlined_call_operand.vmem [shape: f32[32,128], index: 12, kind: input, shape index: {}]
  %s13 = inlined_call_operand.vmem [shape: f32[1,128], index: 13, kind: input, shape index: {}]
  %s14 = inlined_call_operand.hbm [shape: f32[2,128], index: 14, kind: output, shape index: {}]
  %s15 = sld [smem:[#allocation0]]
  $region78: #{tpu_custom_call.1} parent=0
    _
  %s17 = ssub.s32 1, %s15
  %s18 = scalar_select 0, %s17, %s15
  $region1: #{tpu_custom_call.1} parent=0
    #allocation2 [shape = 'u8[8192]{0}', space=vmem, size = 0x2000, scoped, tag = 'input window, operand 1, single buffered']
    #allocation3 [shape = 's32[1]{0}', space=sflag, size = 0x4, scoped, tag = 'scoped memory for tpu_custom_call.1']
    #allocation4 [shape = 's32[1]{0}', space=sflag, size = 0x4, scoped, tag = 'scoped memory for tpu_custom_call.1']
    #allocation5 [shape = 'u8[8192]{0}', space=vmem, size = 0x2000, scoped, tag = 'input window, operand 3, single buffered']
    #allocation6 [shape = 's32[1]{0}', space=sflag, size = 0x4, scoped, tag = 'scoped memory for tpu_custom_call.1']
    #allocation7 [shape = 'u8[1024]{0}', space=vmem, size = 0x400, scoped, tag = 'input window, operand 4, single buffered']
    #allocation8 [shape = 'u8[1024]{0}', space=vmem, size = 0x400, scoped, tag = 'output window, operand 0, single buffered']
    %19 = vsyncpa [#allocation3], 0
    %20 = vsyncpa [#allocation6], 0
    %21 = vsyncpa [#allocation4], 0
    // Predicated region
    $region2: #{tpu_custom_call.1} parent=1 // pred_check
      _
    $region3: #{tpu_custom_call.1} parent=1 // pred_check_branch
      %23 = sbr.rel (0) target = $region5
    $region4: #{tpu_custom_call.1} parent=1 // pred_region
      _
    $region5: #{tpu_custom_call.1} parent=1 // pred_fallthru
      _
    // Predicated region
    $region6: #{tpu_custom_call.1} parent=1 // pred_check
      _
    $region7: #{tpu_custom_call.1} parent=1 // pred_check_branch
      %25 = sbr.rel (0) target = $region9
    $region8: #{tpu_custom_call.1} parent=1 // pred_region
      %s27 = ssub.s32 256, 256
      %28 = vsyncadd [#allocation3], %s27
      %s29 = sshll.u32 [#allocation2], 4
      %s30 = int_to_ptr.vmem [resolvable:$true] %s29
      %35 = dma.hbm_to_vmem [thread:$0]  %s1, 256, %s30, [#allocation3], 128, 128, 8
    $region9: #{tpu_custom_call.1} parent=1 // pred_fallthru
      _
    // Predicated region
    $region10: #{tpu_custom_call.1} parent=1 // pred_check
      _
    $region11: #{tpu_custom_call.1} parent=1 // pred_check_branch
      %37 = sbr.rel (0) target = $region13
    $region12: #{tpu_custom_call.1} parent=1 // pred_region
      _
    $region13: #{tpu_custom_call.1} parent=1 // pred_fallthru
      _
    // Predicated region
    $region14: #{tpu_custom_call.1} parent=1 // pred_check
      _
    $region15: #{tpu_custom_call.1} parent=1 // pred_check_branch
      %39 = sbr.rel (0) target = $region17
    $region16: #{tpu_custom_call.1} parent=1 // pred_region
      %s41 = ssub.s32 256, 256
      %42 = vsyncadd [#allocation6], %s41
      %s43 = sshll.u32 [#allocation5], 4
      %s44 = int_to_ptr.vmem [resolvable:$true] %s43
      %49 = dma.hbm_to_vmem [thread:$0]  %s3, 256, %s44, [#allocation6], 128, 128, 8
    $region17: #{tpu_custom_call.1} parent=1 // pred_fallthru
      _
    // Predicated region
    $region18: #{tpu_custom_call.1} parent=1 // pred_check
      _
    $region19: #{tpu_custom_call.1} parent=1 // pred_check_branch
      %51 = sbr.rel (0) target = $region21
    $region20: #{tpu_custom_call.1} parent=1 // pred_region
      %s53 = ssub.s32 32, 32
      %54 = vsyncadd [#allocation6], %s53
      %s56 = sshll.u32 [#allocation7], 4
      %s57 = int_to_ptr.vmem [resolvable:$true] %s56
      %59 = dma.hbm_to_vmem [thread:$0]  %s4, 32, %s57, [#allocation6]
    $region21: #{tpu_custom_call.1} parent=1 // pred_fallthru
      _
    // Predicated region
    $region22: #{tpu_custom_call.1} parent=1 // pred_check
      _
    $region23: #{tpu_custom_call.1} parent=1 // pred_check_branch
      %61 = sbr.rel (0) target = $region25
    $region24: #{tpu_custom_call.1} parent=1 // pred_region
      _
    $region25: #{tpu_custom_call.1} parent=1 // pred_fallthru
      _
    // Predicated region
    $region26: #{tpu_custom_call.1} parent=1 // pred_check
      _
    $region27: #{tpu_custom_call.1} parent=1 // pred_check_branch
      %63 = sbr.rel (0) target = $region29
    $region28: #{tpu_custom_call.1} parent=1 // pred_region
      _
    $region29: #{tpu_custom_call.1} parent=1 // pred_fallthru
      _
    // Predicated region
    $region30: #{tpu_custom_call.1} parent=1 // pred_check
      _
    $region31: #{tpu_custom_call.1} parent=1 // pred_check_branch
      %65 = sbr.rel (0) target = $region33
    $region32: #{tpu_custom_call.1} parent=1 // pred_region
      _
    $region33: #{tpu_custom_call.1} parent=1 // pred_fallthru
      _
    // Predicated region
    $region34: #{tpu_custom_call.1} parent=1 // pred_check
      _
    $region35: #{tpu_custom_call.1} parent=1 // pred_check_branch
      %67 = sbr.rel (0) target = $region37
    $region36: #{tpu_custom_call.1} parent=1 // pred_region
      _
    $region37: #{tpu_custom_call.1} parent=1 // pred_fallthru
      _
    // Predicated region
    $region38: #{tpu_custom_call.1} parent=1 // pred_check
      _
    $region39: #{tpu_custom_call.1} parent=1 // pred_check_branch
      %69 = sbr.rel (0) target = $region41
    $region40: #{tpu_custom_call.1} parent=1 // pred_region
      _
    $region41: #{tpu_custom_call.1} parent=1 // pred_fallthru
      _
    // Predicated region
    $region42: #{tpu_custom_call.1} parent=1 // pred_check
      _
    $region43: #{tpu_custom_call.1} parent=1 // pred_check_branch
      %71 = sbr.rel (0) target = $region45
    $region44: #{tpu_custom_call.1} parent=1 // pred_region
      _
    $region45: #{tpu_custom_call.1} parent=1 // pred_fallthru
      _
    // Predicated region
    $region46: #{tpu_custom_call.1} parent=1 // pred_check
      _
    $region47: #{tpu_custom_call.1} parent=1 // pred_check_branch
      %73 = sbr.rel (0) target = $region49
    $region48: #{tpu_custom_call.1} parent=1 // pred_region
      _
    $region49: #{tpu_custom_call.1} parent=1 // pred_fallthru
      _
    // Predicated region
    $region50: #{tpu_custom_call.1} parent=1 // pred_check
      _
    $region51: #{tpu_custom_call.1} parent=1 // pred_check_branch
      %75 = sbr.rel (0) target = $region53
    $region52: #{tpu_custom_call.1} parent=1 // pred_region
      _
    $region53: #{tpu_custom_call.1} parent=1 // pred_fallthru
      _
    // Predicated region
    $region54: #{tpu_custom_call.1} parent=1 // pred_check
      _
    $region55: #{tpu_custom_call.1} parent=1 // pred_check_branch
      %77 = sbr.rel (0) target = $region57
    $region56: #{tpu_custom_call.1} parent=1 // pred_region
      _
    $region57: #{tpu_custom_call.1} parent=1 // pred_fallthru
      _
    // Predicated region
    $region58: #{tpu_custom_call.1} parent=1 // pred_check
      _
    $region59: #{tpu_custom_call.1} parent=1 // pred_check_branch
      %79 = sbr.rel (0) target = $region61
    $region60: #{tpu_custom_call.1} parent=1 // pred_region
      %80 = dma.done [#allocation3], 256
    $region61: #{tpu_custom_call.1} parent=1 // pred_fallthru
      _
    // Predicated region
    $region62: #{tpu_custom_call.1} parent=1 // pred_check
      _
    $region63: #{tpu_custom_call.1} parent=1 // pred_check_branch
      %82 = sbr.rel (0) target = $region65
    $region64: #{tpu_custom_call.1} parent=1 // pred_region
      %83 = dma.done [#allocation6], 256
    $region65: #{tpu_custom_call.1} parent=1 // pred_fallthru
      _
    // Predicated region
    $region66: #{tpu_custom_call.1} parent=1 // pred_check
      _
    $region67: #{tpu_custom_call.1} parent=1 // pred_check_branch
      %85 = sbr.rel (0) target = $region69
    $region68: #{tpu_custom_call.1} parent=1 // pred_region
      %86 = dma.done [#allocation6], 32
    $region69: #{tpu_custom_call.1} parent=1 // pred_fallthru
      _
    %v87 = vld [vmem:[%s0] sm:$0xff]
    %v88 = vld [vmem:[%s0 + $0x8] sm:$0xff]
    %v89 = vlaneseq
    %v90 = vand.u32 %v89, 127
    %91 = vset.pattern.permute.xlu0 0
    %92 = vperm.xlu0 %91, %v87
    %v93 = vpop.permute.xlu0 %92
    %94 = vset.pattern.permute.xlu0 0
    %95 = vperm.xlu0 %94, %v88
    %v96 = vpop.permute.xlu0 %95
    %vm97 = vcmp.eq.s32.totalorder %v90, %v93
    %vm98 = vcmp.eq.s32.totalorder %v90, %v96
    %v99 = vsel %vm97, 1, 0
    %v100 = vsel %vm98, 1, 0
    %v101 = vcvt.s32.f32 %v99
    %v102 = vcvt.s32.f32 %v100
    %v103 = vld [vmem:[%s2] sm:$0xff]
    %v104 = vld [vmem:[%s2 + $0x8] sm:$0xff]
    %v105 = vld [vmem:[%s2 + $0x10] sm:$0xff]
    %v106 = vld [vmem:[%s2 + $0x18] sm:$0xff]
    %v107 = vld [vmem:[%s2 + $0x20] sm:$0xff]
    %v108 = vld [vmem:[%s2 + $0x28] sm:$0xff]
    %v109 = vld [vmem:[%s2 + $0x30] sm:$0x3]
    %v110 = vld [vmem:[#allocation5] sm:$0xff]
    %v111 = vld [vmem:[#allocation5 + $0x8] sm:$0xff]
    %vm112 = vcmask 408576
    %v114 = vsel %vm112, %v101, 0
    %v117 = vsel %vm112, %v102, 0
    %vm119 = vcmask 1041408
    %v121 = vsel %vm119, %v109, 0
    %123 = vmatprep.subr.mxu0 0.0
    %124 = vmatpush1.msra.mxu0 0.0
    %125 = vmatprep.subr.mxu0 0.0
    %126 = vmatpush1.msra.mxu0 0.0
    %127 = vmatprep.subr.mxu0 0.0
    %128 = vmatpush1.msra.mxu0 0.0
    %129 = vmatprep.subr.mxu0 0.0
    %130 = vmatpush1.msra.mxu0 0.0
    %131 = vmatprep.subr.mxu0 0.0
    %132 = vmatpush1.msra.mxu0 0.0
    %133 = vmatprep.subr.mxu0 0.0
    %134 = vmatpush1.msra.mxu0 0.0
    %135 = vmatprep.subr.mxu0 0.0
    %136 = vmatpush1.msra.mxu0 0.0
    %137 = vmatprep.subr.mxu0 0.0
    %138 = vmatpush1.msra.mxu0 0.0
    %139 = vmatprep.subr.mxu0 0.0
    %140 = vmatpush1.msra.mxu0 0.0
    %141 = vmatprep.subr.mxu0 0.0
    %142 = vmatpush1.msra.mxu0 %v121
    %143 = vmatprep.subr.mxu0 0.0
    %144 = vmatpush1.msra.mxu0 %v108
    %145 = vmatprep.subr.mxu0 0.0
    %146 = vmatpush1.msra.mxu0 %v107
    %147 = vmatprep.subr.mxu0 0.0
    %148 = vmatpush1.msra.mxu0 %v106
    %149 = vmatprep.subr.mxu0 0.0
    %150 = vmatpush1.msra.mxu0 %v105
    %151 = vmatprep.subr.mxu0 0.0
    %152 = vmatpush1.msra.mxu0 %v104
    %153 = vmatprep.subr.mxu0 0.0
    %154 = vmatpush1.msra.mxu0 %v103
    %155 = vmatprep.subr.mxu0 0.0
    %156 = vmatpush2.msra.mxu0 0.0
    %157 = vmatprep.subr.mxu0 0.0
    %158 = vmatpush2.msra.mxu0 0.0
    %159 = vmatprep.subr.mxu0 0.0
    %160 = vmatpush2.msra.mxu0 0.0
    %161 = vmatprep.subr.mxu0 0.0
    %162 = vmatpush2.msra.mxu0 0.0
    %163 = vmatprep.subr.mxu0 0.0
    %164 = vmatpush2.msra.mxu0 0.0
    %165 = vmatprep.subr.mxu0 0.0
    %166 = vmatpush2.msra.mxu0 0.0
    %167 = vmatprep.subr.mxu0 0.0
    %168 = vmatpush2.msra.mxu0 0.0
    %169 = vmatprep.subr.mxu0 0.0
    %170 = vmatpush2.msra.mxu0 0.0
    %171 = vmatprep.subr.mxu0 0.0
    %172 = vmatpush2.msra.mxu0 0.0
    %173 = vmatprep.subr.mxu0 0.0
    %174 = vmatpush2.msra.mxu0 0.0
    %175 = vmatprep.subr.mxu0 0.0
    %176 = vmatpush2.msra.mxu0 0.0
    %177 = vmatprep.subr.mxu0 0.0
    %178 = vmatpush2.msra.mxu0 0.0
    %179 = vmatprep.subr.mxu0 0.0
    %180 = vmatpush2.msra.mxu0 0.0
    %181 = vmatprep.subr.mxu0 0.0
    %182 = vmatpush2.msra.mxu0 0.0
    %183 = vmatprep.subr.mxu0 0.0
    %184 = vmatpush2.msra.mxu0 0.0
    %185 = vmatprep.subr.mxu0 0.0
    %186 = vmatpush2.msra.mxu0 0.0
    %187 = vmatprep.mubr.f32.mxu0 0.0
    %188 = vmatmul.mubr.f32.gmra.mxu0 %v114
    %v189 = vpop.f32.mrf.mxu0
    %v190 = vadd.f32 %v110, %v189
    %v191 = vpop.f32.mrf.mxu0
    %192 = vmatprep.mubr.f32.mxu0 0.0
    %193 = vmatmul.mubr.f32.gmra.mxu0 %v117
    %v194 = vpop.f32.mrf.mxu0
    %v195 = vadd.f32 %v111, %v194
    %v196 = vpop.f32.mrf.mxu0
    %197 = vdwg.mxu0
    %v198 = vld [vmem:[#allocation7] sm:$0x1]
    %v199 = vld [vmem:[#allocation7 + $0x1] sm:$0x1]
    %vm200 = vcmask 261120
    %v201 = vsel %vm200, %v190, 0.0
    %202 = vadd.xlane.f32.xlu0 %v201
    %v203 = vpop.xlane.xlu0 %202
    %v204 = vsel %vm200, %v195, 0.0
    %205 = vadd.xlane.f32.xlu0 %v204
    %v206 = vpop.xlane.xlu0 %205
    %v207 = vrcp.pop 32.0
    %v208 = vmul.f32 %v203, %v207
    %v209 = vmul.f32 %v206, %v207
    %v210 = vsub.f32 %v190, %v208
    %v211 = vsub.f32 %v195, %v209
    %v212 = vmul.f32 %v210, %v210
    %v213 = vmul.f32 %v211, %v211
    %v214 = vsel %vm200, %v212, 0.0
    %215 = vadd.xlane.f32.xlu0 %v214
    %v216 = vpop.xlane.xlu0 %215
    %v217 = vsel %vm200, %v213, 0.0
    %218 = vadd.xlane.f32.xlu0 %v217
    %v219 = vpop.xlane.xlu0 %218
    %v220 = vmul.f32 %v216, %v207
    %v221 = vmul.f32 %v219, %v207
    %v222 = vadd.f32 %v220, 1e-05
    %v223 = vadd.f32 %v221, 1e-05
    %v224 = vrsqrt.pop %v222
    %v225 = vrsqrt.pop %v223
    %v226 = vmul.f32 %v210, %v224
    %v227 = vmul.f32 %v211, %v225
    %v228 = vlaneseq
    %v229 = vshrl.u32 %v228, 7
    %v230 = vsub.s32 0, %v229
    %v231 = vrot.slane %v198, %v230
    %v232 = vmul.f32 %v226, %v231
    %v233 = vmul.f32 %v227, %v231
    %v234 = vlaneseq
    %v235 = vshrl.u32 %v234, 7
    %v236 = vsub.s32 0, %v235
    %v237 = vrot.slane %v199, %v236
    %v238 = vadd.f32 %v232, %v237
    %v239 = vadd.f32 %v233, %v237
    %v240 = vld [vmem:[#allocation2] sm:$0xff]
    %v241 = vld [vmem:[#allocation2 + $0x8] sm:$0xff]
    %v242 = vld [vmem:[%s11] sm:$0x3f]
    %v243 = vld [vmem:[%s5] sm:$0xff]
    %v244 = vld [vmem:[%s5 + $0x8] sm:$0xff]
    %v245 = vld [vmem:[%s5 + $0x10] sm:$0xff]
    %v246 = vld [vmem:[%s5 + $0x18] sm:$0xff]
    %v247 = vld [vmem:[%s6] sm:$0x1]
    %v249 = vlaneseq
    %v250 = vshrl.u32 %v249, 7
    %v251 = vsub.s32 0, %v250
    %v252 = vrot.slane %v247, %v251
    %v255 = vsel %vm200, %v238, 0
    %v258 = vsel %vm200, %v239, 0
    %260 = vmatprep.subr.mxu0 0.0
    %261 = vmatpush1.msra.mxu0 0.0
    %262 = vmatprep.subr.mxu0 0.0
    %263 = vmatpush1.msra.mxu0 0.0
    %264 = vmatprep.subr.mxu0 0.0
    %265 = vmatpush1.msra.mxu0 0.0
    %266 = vmatprep.subr.mxu0 0.0
    %267 = vmatpush1.msra.mxu0 0.0
    %268 = vmatprep.subr.mxu0 0.0
    %269 = vmatpush1.msra.mxu0 0.0
    %270 = vmatprep.subr.mxu0 0.0
    %271 = vmatpush1.msra.mxu0 0.0
    %272 = vmatprep.subr.mxu0 0.0
    %273 = vmatpush1.msra.mxu0 0.0
    %274 = vmatprep.subr.mxu0 0.0
    %275 = vmatpush1.msra.mxu0 0.0
    %276 = vmatprep.subr.mxu0 0.0
    %277 = vmatpush1.msra.mxu0 0.0
    %278 = vmatprep.subr.mxu0 0.0
    %279 = vmatpush1.msra.mxu0 0.0
    %280 = vmatprep.subr.mxu0 0.0
    %281 = vmatpush1.msra.mxu0 0.0
    %282 = vmatprep.subr.mxu0 0.0
    %283 = vmatpush1.msra.mxu0 0.0
    %284 = vmatprep.subr.mxu0 0.0
    %285 = vmatpush1.msra.mxu0 %v246
    %286 = vmatprep.subr.mxu0 0.0
    %287 = vmatpush1.msra.mxu0 %v245
    %288 = vmatprep.subr.mxu0 0.0
    %289 = vmatpush1.msra.mxu0 %v244
    %290 = vmatprep.subr.mxu0 0.0
    %291 = vmatpush1.msra.mxu0 %v243
    %292 = vmatprep.subr.mxu0 0.0
    %293 = vmatpush2.msra.mxu0 0.0
    %294 = vmatprep.subr.mxu0 0.0
    %295 = vmatpush2.msra.mxu0 0.0
    %296 = vmatprep.subr.mxu0 0.0
    %297 = vmatpush2.msra.mxu0 0.0
    %298 = vmatprep.subr.mxu0 0.0
    %299 = vmatpush2.msra.mxu0 0.0
    %300 = vmatprep.subr.mxu0 0.0
    %301 = vmatpush2.msra.mxu0 0.0
    %302 = vmatprep.subr.mxu0 0.0
    %303 = vmatpush2.msra.mxu0 0.0
    %304 = vmatprep.subr.mxu0 0.0
    %305 = vmatpush2.msra.mxu0 0.0
    %306 = vmatprep.subr.mxu0 0.0
    %307 = vmatpush2.msra.mxu0 0.0
    %308 = vmatprep.subr.mxu0 0.0
    %309 = vmatpush2.msra.mxu0 0.0
    %310 = vmatprep.subr.mxu0 0.0
    %311 = vmatpush2.msra.mxu0 0.0
    %312 = vmatprep.subr.mxu0 0.0
    %313 = vmatpush2.msra.mxu0 0.0
    %314 = vmatprep.subr.mxu0 0.0
    %315 = vmatpush2.msra.mxu0 0.0
    %316 = vmatprep.subr.mxu0 0.0
    %317 = vmatpush2.msra.mxu0 0.0
    %318 = vmatprep.subr.mxu0 0.0
    %319 = vmatpush2.msra.mxu0 0.0
    %320 = vmatprep.subr.mxu0 0.0
    %321 = vmatpush2.msra.mxu0 0.0
    %322 = vmatprep.subr.mxu0 0.0
    %323 = vmatpush2.msra.mxu0 0.0
    %324 = vmatprep.mubr.f32.mxu0 0.0
    %325 = vmatmul.mubr.f32.gmra.mxu0 %v255
    %v326 = vpop.f32.mrf.mxu0
    %v327 = vadd.f32 %v252, %v326
    %v328 = vpop.f32.mrf.mxu0
    %329 = vmatprep.mubr.f32.mxu0 0.0
    %330 = vmatmul.mubr.f32.gmra.mxu0 %v258
    %v331 = vpop.f32.mrf.mxu0
    %v332 = vadd.f32 %v252, %v331
    %v333 = vpop.f32.mrf.mxu0
    %334 = vdwg.mxu0
    %337 = vrot.lane.b32.xlu0 %v327, 96
    %v338 = vpop.permute.xlu0 %337
    %339 = vrot.lane.b32.xlu0 %v332, 96
    %v340 = vpop.permute.xlu0 %339
    %vm341 = vcmask 130048
    %v342 = vsel %vm341, %v327, 0
    %v344 = vsel %vm341, %v332, 0
    %v346 = vsel %vm341, %v338, 0
    %v348 = vsel %vm341, %v340, 0
    %350 = vmatprep.subr.mxu0 0.0
    %351 = vmatpush1.xpose.msra.mxu0 0.0
    %352 = vmatprep.subr.mxu0 0.0
    %353 = vmatpush1.xpose.msra.mxu0 0.0
    %354 = vmatprep.subr.mxu0 0.0
    %355 = vmatpush1.xpose.msra.mxu0 0.0
    %356 = vmatprep.subr.mxu0 0.0
    %357 = vmatpush1.xpose.msra.mxu0 0.0
    %358 = vmatprep.subr.mxu0 0.0
    %359 = vmatpush1.xpose.msra.mxu0 0.0
    %360 = vmatprep.subr.mxu0 0.0
    %361 = vmatpush1.xpose.msra.mxu0 0.0
    %362 = vmatprep.subr.mxu0 0.0
    %363 = vmatpush1.xpose.msra.mxu0 0.0
    %364 = vmatprep.subr.mxu0 0.0
    %365 = vmatpush1.xpose.msra.mxu0 0.0
    %366 = vmatprep.subr.mxu0 0.0
    %367 = vmatpush1.xpose.msra.mxu0 0.0
    %368 = vmatprep.subr.mxu0 0.0
    %369 = vmatpush1.xpose.msra.mxu0 0.0
    %370 = vmatprep.subr.mxu0 0.0
    %371 = vmatpush1.xpose.msra.mxu0 0.0
    %372 = vmatprep.subr.mxu0 0.0
    %373 = vmatpush1.xpose.msra.mxu0 0.0
    %374 = vmatprep.subr.mxu0 0.0
    %375 = vmatpush1.xpose.msra.mxu0 0.0
    %376 = vmatprep.subr.mxu0 0.0
    %377 = vmatpush1.xpose.msra.mxu0 0.0
    %378 = vmatprep.subr.mxu0 0.0
    %379 = vmatpush1.xpose.msra.mxu0 %v348
    %380 = vmatprep.subr.mxu0 0.0
    %381 = vmatpush1.xpose.msra.mxu0 %v346
    %382 = vmatprep.subr.mxu0 0.0
    %383 = vmatpush2.xpose.msra.mxu0 0.0
    %384 = vmatprep.subr.mxu0 0.0
    %385 = vmatpush2.xpose.msra.mxu0 0.0
    %386 = vmatprep.subr.mxu0 0.0
    %387 = vmatpush2.xpose.msra.mxu0 0.0
    %388 = vmatprep.subr.mxu0 0.0
    %389 = vmatpush2.xpose.msra.mxu0 0.0
    %390 = vmatprep.subr.mxu0 0.0
    %391 = vmatpush2.xpose.msra.mxu0 0.0
    %392 = vmatprep.subr.mxu0 0.0
    %393 = vmatpush2.xpose.msra.mxu0 0.0
    %394 = vmatprep.subr.mxu0 0.0
    %395 = vmatpush2.xpose.msra.mxu0 0.0
    %396 = vmatprep.subr.mxu0 0.0
    %397 = vmatpush2.xpose.msra.mxu0 0.0
    %398 = vmatprep.subr.mxu0 0.0
    %399 = vmatpush2.xpose.msra.mxu0 0.0
    %400 = vmatprep.subr.mxu0 0.0
    %401 = vmatpush2.xpose.msra.mxu0 0.0
    %402 = vmatprep.subr.mxu0 0.0
    %403 = vmatpush2.xpose.msra.mxu0 0.0
    %404 = vmatprep.subr.mxu0 0.0
    %405 = vmatpush2.xpose.msra.mxu0 0.0
    %406 = vmatprep.subr.mxu0 0.0
    %407 = vmatpush2.xpose.msra.mxu0 0.0
    %408 = vmatprep.subr.mxu0 0.0
    %409 = vmatpush2.xpose.msra.mxu0 0.0
    %410 = vmatprep.subr.mxu0 0.0
    %411 = vmatpush2.xpose.msra.mxu0 0.0
    %412 = vmatprep.subr.mxu0 0.0
    %413 = vmatpush2.xpose.msra.mxu0 0.0
    %414 = vmatprep.mubr.f32.mxu0 0.0
    %415 = vmatmul.mubr.f32.gmra.mxu0 %v342
    %v416 = vpop.f32.mrf.mxu0
    %v417 = vadd.f32 0.0, %v416
    %v418 = vpop.f32.mrf.mxu0
    %419 = vmatprep.mubr.f32.mxu0 0.0
    %420 = vmatmul.mubr.f32.gmra.mxu0 %v344
    %v421 = vpop.f32.mrf.mxu0
    %v422 = vadd.f32 0.0, %v421
    %v423 = vpop.f32.mrf.mxu0
    %424 = vdwg.mxu0
    %v425 = vmul.f32 %v417, 0.25
    %v426 = vmul.f32 %v422, 0.25
    %v427 = vadd.f32 %v425, %v240
    %v428 = vadd.f32 %v426, %v241
    %v429 = vsel %vm341, %v427, -inf
    %430 = vmax.xlane.f32.xlu0 %v429
    %v431 = vpop.xlane.xlu0 %430
    %v432 = vsel %vm341, %v428, -inf
    %433 = vmax.xlane.f32.xlu0 %v432
    %v434 = vpop.xlane.xlu0 %433
    %v435 = vsub.f32 %v427, %v431
    %v436 = vsub.f32 %v428, %v434
    %v437 = vmul.f32 %v435, 1.442695
    %v438 = vpow.pop %v437
    %v439 = vmul.f32 %v436, 1.442695
    %v440 = vpow.pop %v439
    %v441 = vsel %vm341, %v438, 0.0
    %442 = vadd.xlane.f32.xlu0 %v441
    %v443 = vpop.xlane.xlu0 %442
    %v444 = vsel %vm341, %v440, 0.0
    %445 = vadd.xlane.f32.xlu0 %v444
    %v446 = vpop.xlane.xlu0 %445
    %v447 = vrcp.pop %v443
    %v448 = vrcp.pop %v446
    %v449 = vmul.f32 %v438, %v447
    %v450 = vmul.f32 %v440, %v448
    %451 = vrot.lane.b32.xlu0 %v327, 64
    %v452 = vpop.permute.xlu0 %451
    %453 = vrot.lane.b32.xlu0 %v332, 64
    %v454 = vpop.permute.xlu0 %453
    %v458 = vsel %vm341, %v449, 0
    %v461 = vsel %vm341, %v450, 0
    %463 = vmatprep.subr.mxu0 0.0
    %464 = vmatpush1.msra.mxu0 0.0
    %465 = vmatprep.subr.mxu0 0.0
    %466 = vmatpush1.msra.mxu0 0.0
    %467 = vmatprep.subr.mxu0 0.0
    %468 = vmatpush1.msra.mxu0 0.0
    %469 = vmatprep.subr.mxu0 0.0
    %470 = vmatpush1.msra.mxu0 0.0
    %471 = vmatprep.subr.mxu0 0.0
    %472 = vmatpush1.msra.mxu0 0.0
    %473 = vmatprep.subr.mxu0 0.0
    %474 = vmatpush1.msra.mxu0 0.0
    %475 = vmatprep.subr.mxu0 0.0
    %476 = vmatpush1.msra.mxu0 0.0
    %477 = vmatprep.subr.mxu0 0.0
    %478 = vmatpush1.msra.mxu0 0.0
    %479 = vmatprep.subr.mxu0 0.0
    %480 = vmatpush1.msra.mxu0 0.0
    %481 = vmatprep.subr.mxu0 0.0
    %482 = vmatpush1.msra.mxu0 0.0
    %483 = vmatprep.subr.mxu0 0.0
    %484 = vmatpush1.msra.mxu0 0.0
    %485 = vmatprep.subr.mxu0 0.0
    %486 = vmatpush1.msra.mxu0 0.0
    %487 = vmatprep.subr.mxu0 0.0
    %488 = vmatpush1.msra.mxu0 0.0
    %489 = vmatprep.subr.mxu0 0.0
    %490 = vmatpush1.msra.mxu0 0.0
    %491 = vmatprep.subr.mxu0 0.0
    %492 = vmatpush1.msra.mxu0 %v454
    %493 = vmatprep.subr.mxu0 0.0
    %494 = vmatpush1.msra.mxu0 %v452
    %495 = vmatprep.subr.mxu0 0.0
    %496 = vmatpush2.msra.mxu0 0.0
    %497 = vmatprep.subr.mxu0 0.0
    %498 = vmatpush2.msra.mxu0 0.0
    %499 = vmatprep.subr.mxu0 0.0
    %500 = vmatpush2.msra.mxu0 0.0
    %501 = vmatprep.subr.mxu0 0.0
    %502 = vmatpush2.msra.mxu0 0.0
    %503 = vmatprep.subr.mxu0 0.0
    %504 = vmatpush2.msra.mxu0 0.0
    %505 = vmatprep.subr.mxu0 0.0
    %506 = vmatpush2.msra.mxu0 0.0
    %507 = vmatprep.subr.mxu0 0.0
    %508 = vmatpush2.msra.mxu0 0.0
    %509 = vmatprep.subr.mxu0 0.0
    %510 = vmatpush2.msra.mxu0 0.0
    %511 = vmatprep.subr.mxu0 0.0
    %512 = vmatpush2.msra.mxu0 0.0
    %513 = vmatprep.subr.mxu0 0.0
    %514 = vmatpush2.msra.mxu0 0.0
    %515 = vmatprep.subr.mxu0 0.0
    %516 = vmatpush2.msra.mxu0 0.0
    %517 = vmatprep.subr.mxu0 0.0
    %518 = vmatpush2.msra.mxu0 0.0
    %519 = vmatprep.subr.mxu0 0.0
    %520 = vmatpush2.msra.mxu0 0.0
    %521 = vmatprep.subr.mxu0 0.0
    %522 = vmatpush2.msra.mxu0 0.0
    %523 = vmatprep.subr.mxu0 0.0
    %524 = vmatpush2.msra.mxu0 0.0
    %525 = vmatprep.subr.mxu0 0.0
    %526 = vmatpush2.msra.mxu0 0.0
    %527 = vmatprep.mubr.f32.mxu0 0.0
    %528 = vmatmul.mubr.f32.gmra.mxu0 %v458
    %v529 = vpop.f32.mrf.mxu0
    %v530 = vadd.f32 0.0, %v529
    %v531 = vpop.f32.mrf.mxu0
    %532 = vmatprep.mubr.f32.mxu0 0.0
    %533 = vmatmul.mubr.f32.gmra.mxu0 %v461
    %v534 = vpop.f32.mrf.mxu0
    %v535 = vadd.f32 0.0, %v534
    %v536 = vpop.f32.mrf.mxu0
    %537 = vdwg.mxu0
    %v538 = vld [vmem:[%s7] sm:$0xff]
    %v539 = vld [vmem:[%s7 + $0x8] sm:$0xff]
    %540 = vrot.lane.b32.xlu0 %v327, 112
    %v541 = vpop.permute.xlu0 %540
    %542 = vrot.lane.b32.xlu0 %v332, 112
    %v543 = vpop.permute.xlu0 %542
    %544 = vrot.lane.b32.xlu0 %v327, 80
    %v545 = vpop.permute.xlu0 %544
    %546 = vrot.lane.b32.xlu0 %v332, 80
    %v547 = vpop.permute.xlu0 %546
    %v548 = vsel %vm341, %v541, 0
    %v550 = vsel %vm341, %v543, 0
    %v552 = vsel %vm341, %v545, 0
    %v554 = vsel %vm341, %v547, 0
    %556 = vmatprep.subr.mxu0 0.0
    %557 = vmatpush1.xpose.msra.mxu0 0.0
    %558 = vmatprep.subr.mxu0 0.0
    %559 = vmatpush1.xpose.msra.mxu0 0.0
    %560 = vmatprep.subr.mxu0 0.0
    %561 = vmatpush1.xpose.msra.mxu0 0.0
    %562 = vmatprep.subr.mxu0 0.0
    %563 = vmatpush1.xpose.msra.mxu0 0.0
    %564 = vmatprep.subr.mxu0 0.0
    %565 = vmatpush1.xpose.msra.mxu0 0.0
    %566 = vmatprep.subr.mxu0 0.0
    %567 = vmatpush1.xpose.msra.mxu0 0.0
    %568 = vmatprep.subr.mxu0 0.0
    %569 = vmatpush1.xpose.msra.mxu0 0.0
    %570 = vmatprep.subr.mxu0 0.0
    %571 = vmatpush1.xpose.msra.mxu0 0.0
    %572 = vmatprep.subr.mxu0 0.0
    %573 = vmatpush1.xpose.msra.mxu0 0.0
    %574 = vmatprep.subr.mxu0 0.0
    %575 = vmatpush1.xpose.msra.mxu0 0.0
    %576 = vmatprep.subr.mxu0 0.0
    %577 = vmatpush1.xpose.msra.mxu0 0.0
    %578 = vmatprep.subr.mxu0 0.0
    %579 = vmatpush1.xpose.msra.mxu0 0.0
    %580 = vmatprep.subr.mxu0 0.0
    %581 = vmatpush1.xpose.msra.mxu0 0.0
    %582 = vmatprep.subr.mxu0 0.0
    %583 = vmatpush1.xpose.msra.mxu0 0.0
    %584 = vmatprep.subr.mxu0 0.0
    %585 = vmatpush1.xpose.msra.mxu0 %v554
    %586 = vmatprep.subr.mxu0 0.0
    %587 = vmatpush1.xpose.msra.mxu0 %v552
    %588 = vmatprep.subr.mxu0 0.0
    %589 = vmatpush2.xpose.msra.mxu0 0.0
    %590 = vmatprep.subr.mxu0 0.0
    %591 = vmatpush2.xpose.msra.mxu0 0.0
    %592 = vmatprep.subr.mxu0 0.0
    %593 = vmatpush2.xpose.msra.mxu0 0.0
    %594 = vmatprep.subr.mxu0 0.0
    %595 = vmatpush2.xpose.msra.mxu0 0.0
    %596 = vmatprep.subr.mxu0 0.0
    %597 = vmatpush2.xpose.msra.mxu0 0.0
    %598 = vmatprep.subr.mxu0 0.0
    %599 = vmatpush2.xpose.msra.mxu0 0.0
    %600 = vmatprep.subr.mxu0 0.0
    %601 = vmatpush2.xpose.msra.mxu0 0.0
    %602 = vmatprep.subr.mxu0 0.0
    %603 = vmatpush2.xpose.msra.mxu0 0.0
    %604 = vmatprep.subr.mxu0 0.0
    %605 = vmatpush2.xpose.msra.mxu0 0.0
    %606 = vmatprep.subr.mxu0 0.0
    %607 = vmatpush2.xpose.msra.mxu0 0.0
    %608 = vmatprep.subr.mxu0 0.0
    %609 = vmatpush2.xpose.msra.mxu0 0.0
    %610 = vmatprep.subr.mxu0 0.0
    %611 = vmatpush2.xpose.msra.mxu0 0.0
    %612 = vmatprep.subr.mxu0 0.0
    %613 = vmatpush2.xpose.msra.mxu0 0.0
    %614 = vmatprep.subr.mxu0 0.0
    %615 = vmatpush2.xpose.msra.mxu0 0.0
    %616 = vmatprep.subr.mxu0 0.0
    %617 = vmatpush2.xpose.msra.mxu0 0.0
    %618 = vmatprep.subr.mxu0 0.0
    %619 = vmatpush2.xpose.msra.mxu0 0.0
    %620 = vmatprep.mubr.f32.mxu0 0.0
    %621 = vmatmul.mubr.f32.gmra.mxu0 %v548
    %v622 = vpop.f32.mrf.mxu0
    %v623 = vadd.f32 0.0, %v622
    %v624 = vpop.f32.mrf.mxu0
    %625 = vmatprep.mubr.f32.mxu0 0.0
    %626 = vmatmul.mubr.f32.gmra.mxu0 %v550
    %v627 = vpop.f32.mrf.mxu0
    %v628 = vadd.f32 0.0, %v627
    %v629 = vpop.f32.mrf.mxu0
    %630 = vdwg.mxu0
    %v631 = vmul.f32 %v623, 0.25
    %v632 = vmul.f32 %v628, 0.25
    %v633 = vadd.f32 %v631, %v240
    %v634 = vadd.f32 %v632, %v241
    %v635 = vsel %vm341, %v633, -inf
    %636 = vmax.xlane.f32.xlu0 %v635
    %v637 = vpop.xlane.xlu0 %636
    %v638 = vsel %vm341, %v634, -inf
    %639 = vmax.xlane.f32.xlu0 %v638
    %v640 = vpop.xlane.xlu0 %639
    %v641 = vsub.f32 %v633, %v637
    %v642 = vsub.f32 %v634, %v640
    %v643 = vmul.f32 %v641, 1.442695
    %v644 = vpow.pop %v643
    %v645 = vmul.f32 %v642, 1.442695
    %v646 = vpow.pop %v645
    %v647 = vsel %vm341, %v644, 0.0
    %648 = vadd.xlane.f32.xlu0 %v647
    %v649 = vpop.xlane.xlu0 %648
    %v650 = vsel %vm341, %v646, 0.0
    %651 = vadd.xlane.f32.xlu0 %v650
    %v652 = vpop.xlane.xlu0 %651
    %v653 = vrcp.pop %v649
    %v654 = vrcp.pop %v652
    %v655 = vmul.f32 %v644, %v653
    %v656 = vmul.f32 %v646, %v654
    %657 = vrot.lane.b32.xlu0 %v327, 48
    %v658 = vpop.permute.xlu0 %657
    %659 = vrot.lane.b32.xlu0 %v332, 48
    %v660 = vpop.permute.xlu0 %659
    %v664 = vsel %vm341, %v655, 0
    %v667 = vsel %vm341, %v656, 0
    %669 = vmatprep.subr.mxu0 0.0
    %670 = vmatpush1.msra.mxu0 0.0
    %671 = vmatprep.subr.mxu0 0.0
    %672 = vmatpush1.msra.mxu0 0.0
    %673 = vmatprep.subr.mxu0 0.0
    %674 = vmatpush1.msra.mxu0 0.0
    %675 = vmatprep.subr.mxu0 0.0
    %676 = vmatpush1.msra.mxu0 0.0
    %677 = vmatprep.subr.mxu0 0.0
    %678 = vmatpush1.msra.mxu0 0.0
    %679 = vmatprep.subr.mxu0 0.0
    %680 = vmatpush1.msra.mxu0 0.0
    %681 = vmatprep.subr.mxu0 0.0
    %682 = vmatpush1.msra.mxu0 0.0
    %683 = vmatprep.subr.mxu0 0.0
    %684 = vmatpush1.msra.mxu0 0.0
    %685 = vmatprep.subr.mxu0 0.0
    %686 = vmatpush1.msra.mxu0 0.0
    %687 = vmatprep.subr.mxu0 0.0
    %688 = vmatpush1.msra.mxu0 0.0
    %689 = vmatprep.subr.mxu0 0.0
    %690 = vmatpush1.msra.mxu0 0.0
    %691 = vmatprep.subr.mxu0 0.0
    %692 = vmatpush1.msra.mxu0 0.0
    %693 = vmatprep.subr.mxu0 0.0
    %694 = vmatpush1.msra.mxu0 0.0
    %695 = vmatprep.subr.mxu0 0.0
    %696 = vmatpush1.msra.mxu0 0.0
    %697 = vmatprep.subr.mxu0 0.0
    %698 = vmatpush1.msra.mxu0 %v660
    %699 = vmatprep.subr.mxu0 0.0
    %700 = vmatpush1.msra.mxu0 %v658
    %701 = vmatprep.subr.mxu0 0.0
    %702 = vmatpush2.msra.mxu0 0.0
    %703 = vmatprep.subr.mxu0 0.0
    %704 = vmatpush2.msra.mxu0 0.0
    %705 = vmatprep.subr.mxu0 0.0
    %706 = vmatpush2.msra.mxu0 0.0
    %707 = vmatprep.subr.mxu0 0.0
    %708 = vmatpush2.msra.mxu0 0.0
    %709 = vmatprep.subr.mxu0 0.0
    %710 = vmatpush2.msra.mxu0 0.0
    %711 = vmatprep.subr.mxu0 0.0
    %712 = vmatpush2.msra.mxu0 0.0
    %713 = vmatprep.subr.mxu0 0.0
    %714 = vmatpush2.msra.mxu0 0.0
    %715 = vmatprep.subr.mxu0 0.0
    %716 = vmatpush2.msra.mxu0 0.0
    %717 = vmatprep.subr.mxu0 0.0
    %718 = vmatpush2.msra.mxu0 0.0
    %719 = vmatprep.subr.mxu0 0.0
    %720 = vmatpush2.msra.mxu0 0.0
    %721 = vmatprep.subr.mxu0 0.0
    %722 = vmatpush2.msra.mxu0 0.0
    %723 = vmatprep.subr.mxu0 0.0
    %724 = vmatpush2.msra.mxu0 0.0
    %725 = vmatprep.subr.mxu0 0.0
    %726 = vmatpush2.msra.mxu0 0.0
    %727 = vmatprep.subr.mxu0 0.0
    %728 = vmatpush2.msra.mxu0 0.0
    %729 = vmatprep.subr.mxu0 0.0
    %730 = vmatpush2.msra.mxu0 0.0
    %731 = vmatprep.subr.mxu0 0.0
    %732 = vmatpush2.msra.mxu0 0.0
    %733 = vmatprep.mubr.f32.mxu0 0.0
    %734 = vmatmul.mubr.f32.gmra.mxu0 %v664
    %v735 = vpop.f32.mrf.mxu0
    %v736 = vadd.f32 0.0, %v735
    %v737 = vpop.f32.mrf.mxu0
    %738 = vmatprep.mubr.f32.mxu0 0.0
    %739 = vmatmul.mubr.f32.gmra.mxu0 %v667
    %v740 = vpop.f32.mrf.mxu0
    %v741 = vadd.f32 0.0, %v740
    %v742 = vpop.f32.mrf.mxu0
    %743 = vdwg.mxu0
    %s744 = scalar_lea.vmem %s7, 16
    %v745 = vld [vmem:[%s744] sm:$0xff]
    %v746 = vld [vmem:[%s744 + $0x8] sm:$0xff]
    %v748 = vsel %vm341, %v736, 0
    %v751 = vsel %vm341, %v741, 0
    %753 = vmatprep.subr.mxu0 0.0
    %754 = vmatpush1.msra.mxu0 0.0
    %755 = vmatprep.subr.mxu0 0.0
    %756 = vmatpush1.msra.mxu0 0.0
    %757 = vmatprep.subr.mxu0 0.0
    %758 = vmatpush1.msra.mxu0 0.0
    %759 = vmatprep.subr.mxu0 0.0
    %760 = vmatpush1.msra.mxu0 0.0
    %761 = vmatprep.subr.mxu0 0.0
    %762 = vmatpush1.msra.mxu0 0.0
    %763 = vmatprep.subr.mxu0 0.0
    %764 = vmatpush1.msra.mxu0 0.0
    %765 = vmatprep.subr.mxu0 0.0
    %766 = vmatpush1.msra.mxu0 0.0
    %767 = vmatprep.subr.mxu0 0.0
    %768 = vmatpush1.msra.mxu0 0.0
    %769 = vmatprep.subr.mxu0 0.0
    %770 = vmatpush1.msra.mxu0 0.0
    %771 = vmatprep.subr.mxu0 0.0
    %772 = vmatpush1.msra.mxu0 0.0
    %773 = vmatprep.subr.mxu0 0.0
    %774 = vmatpush1.msra.mxu0 0.0
    %775 = vmatprep.subr.mxu0 0.0
    %776 = vmatpush1.msra.mxu0 0.0
    %777 = vmatprep.subr.mxu0 0.0
    %778 = vmatpush1.msra.mxu0 0.0
    %779 = vmatprep.subr.mxu0 0.0
    %780 = vmatpush1.msra.mxu0 0.0
    %781 = vmatprep.subr.mxu0 0.0
    %782 = vmatpush1.msra.mxu0 %v746
    %783 = vmatprep.subr.mxu0 0.0
    %784 = vmatpush1.msra.mxu0 %v745
    %785 = vmatprep.subr.mxu0 0.0
    %786 = vmatpush2.msra.mxu0 0.0
    %787 = vmatprep.subr.mxu0 0.0
    %788 = vmatpush2.msra.mxu0 0.0
    %789 = vmatprep.subr.mxu0 0.0
    %790 = vmatpush2.msra.mxu0 0.0
    %791 = vmatprep.subr.mxu0 0.0
    %792 = vmatpush2.msra.mxu0 0.0
    %793 = vmatprep.subr.mxu0 0.0
    %794 = vmatpush2.msra.mxu0 0.0
    %795 = vmatprep.subr.mxu0 0.0
    %796 = vmatpush2.msra.mxu0 0.0
    %797 = vmatprep.subr.mxu0 0.0
    %798 = vmatpush2.msra.mxu0 0.0
    %799 = vmatprep.subr.mxu0 0.0
    %800 = vmatpush2.msra.mxu0 0.0
    %801 = vmatprep.subr.mxu0 0.0
    %802 = vmatpush2.msra.mxu0 0.0
    %803 = vmatprep.subr.mxu0 0.0
    %804 = vmatpush2.msra.mxu0 0.0
    %805 = vmatprep.subr.mxu0 0.0
    %806 = vmatpush2.msra.mxu0 0.0
    %807 = vmatprep.subr.mxu0 0.0
    %808 = vmatpush2.msra.mxu0 0.0
    %809 = vmatprep.subr.mxu0 0.0
    %810 = vmatpush2.msra.mxu0 0.0
    %811 = vmatprep.subr.mxu0 0.0
    %812 = vmatpush2.msra.mxu0 0.0
    %813 = vmatprep.subr.mxu0 0.0
    %814 = vmatpush2.msra.mxu0 0.0
    %815 = vmatprep.subr.mxu0 0.0
    %816 = vmatpush2.msra.mxu0 0.0
    %817 = vmatprep.mubr.f32.mxu0 0.0
    %818 = vmatmul.mubr.f32.gmra.mxu0 %v748
    %v819 = vpop.f32.mrf.mxu0
    %v820 = vadd.f32 0.0, %v819
    %v821 = vpop.f32.mrf.mxu0
    %822 = vmatprep.mubr.f32.mxu0 0.0
    %823 = vmatmul.mubr.f32.gmra.mxu0 %v751
    %v824 = vpop.f32.mrf.mxu0
    %v825 = vadd.f32 0.0, %v824
    %v826 = vpop.f32.mrf.mxu0
    %827 = vdwg.mxu0
    %v829 = vsel %vm341, %v530, 0
    %v832 = vsel %vm341, %v535, 0
    %834 = vmatprep.subr.mxu0 0.0
    %835 = vmatpush1.msra.mxu0 0.0
    %836 = vmatprep.subr.mxu0 0.0
    %837 = vmatpush1.msra.mxu0 0.0
    %838 = vmatprep.subr.mxu0 0.0
    %839 = vmatpush1.msra.mxu0 0.0
    %840 = vmatprep.subr.mxu0 0.0
    %841 = vmatpush1.msra.mxu0 0.0
    %842 = vmatprep.subr.mxu0 0.0
    %843 = vmatpush1.msra.mxu0 0.0
    %844 = vmatprep.subr.mxu0 0.0
    %845 = vmatpush1.msra.mxu0 0.0
    %846 = vmatprep.subr.mxu0 0.0
    %847 = vmatpush1.msra.mxu0 0.0
    %848 = vmatprep.subr.mxu0 0.0
    %849 = vmatpush1.msra.mxu0 0.0
    %850 = vmatprep.subr.mxu0 0.0
    %851 = vmatpush1.msra.mxu0 0.0
    %852 = vmatprep.subr.mxu0 0.0
    %853 = vmatpush1.msra.mxu0 0.0
    %854 = vmatprep.subr.mxu0 0.0
    %855 = vmatpush1.msra.mxu0 0.0
    %856 = vmatprep.subr.mxu0 0.0
    %857 = vmatpush1.msra.mxu0 0.0
    %858 = vmatprep.subr.mxu0 0.0
    %859 = vmatpush1.msra.mxu0 0.0
    %860 = vmatprep.subr.mxu0 0.0
    %861 = vmatpush1.msra.mxu0 0.0
    %862 = vmatprep.subr.mxu0 0.0
    %863 = vmatpush1.msra.mxu0 %v539
    %864 = vmatprep.subr.mxu0 0.0
    %865 = vmatpush1.msra.mxu0 %v538
    %866 = vmatprep.subr.mxu0 0.0
    %867 = vmatpush2.msra.mxu0 0.0
    %868 = vmatprep.subr.mxu0 0.0
    %869 = vmatpush2.msra.mxu0 0.0
    %870 = vmatprep.subr.mxu0 0.0
    %871 = vmatpush2.msra.mxu0 0.0
    %872 = vmatprep.subr.mxu0 0.0
    %873 = vmatpush2.msra.mxu0 0.0
    %874 = vmatprep.subr.mxu0 0.0
    %875 = vmatpush2.msra.mxu0 0.0
    %876 = vmatprep.subr.mxu0 0.0
    %877 = vmatpush2.msra.mxu0 0.0
    %878 = vmatprep.subr.mxu0 0.0
    %879 = vmatpush2.msra.mxu0 0.0
    %880 = vmatprep.subr.mxu0 0.0
    %881 = vmatpush2.msra.mxu0 0.0
    %882 = vmatprep.subr.mxu0 0.0
    %883 = vmatpush2.msra.mxu0 0.0
    %884 = vmatprep.subr.mxu0 0.0
    %885 = vmatpush2.msra.mxu0 0.0
    %886 = vmatprep.subr.mxu0 0.0
    %887 = vmatpush2.msra.mxu0 0.0
    %888 = vmatprep.subr.mxu0 0.0
    %889 = vmatpush2.msra.mxu0 0.0
    %890 = vmatprep.subr.mxu0 0.0
    %891 = vmatpush2.msra.mxu0 0.0
    %892 = vmatprep.subr.mxu0 0.0
    %893 = vmatpush2.msra.mxu0 0.0
    %894 = vmatprep.subr.mxu0 0.0
    %895 = vmatpush2.msra.mxu0 0.0
    %896 = vmatprep.subr.mxu0 0.0
    %897 = vmatpush2.msra.mxu0 0.0
    %898 = vmatprep.mubr.f32.mxu0 0.0
    %899 = vmatmul.mubr.f32.gmra.mxu0 %v829
    %v900 = vpop.f32.mrf.mxu0
    %v901 = vadd.f32 %v820, %v900
    %v902 = vpop.f32.mrf.mxu0
    %903 = vmatprep.mubr.f32.mxu0 0.0
    %904 = vmatmul.mubr.f32.gmra.mxu0 %v832
    %v905 = vpop.f32.mrf.mxu0
    %v906 = vadd.f32 %v825, %v905
    %v907 = vpop.f32.mrf.mxu0
    %908 = vdwg.mxu0
    %v909 = vlaneseq
    %v910 = vshrl.u32 %v909, 7
    %v911 = vsub.s32 0, %v910
    %v912 = vrot.slane %v242, %v911
    %v913 = vadd.f32 %v901, %v912
    %v914 = vadd.f32 %v906, %v912
    %v915 = vadd.f32 %v238, %v913
    %v916 = vadd.f32 %v239, %v914
    %v917 = vsel %vm200, %v915, 0.0
    %918 = vadd.xlane.f32.xlu0 %v917
    %v919 = vpop.xlane.xlu0 %918
    %v920 = vsel %vm200, %v916, 0.0
    %921 = vadd.xlane.f32.xlu0 %v920
    %v922 = vpop.xlane.xlu0 %921
    %v923 = vmul.f32 %v919, %v207
    %v924 = vmul.f32 %v922, %v207
    %v925 = vsub.f32 %v915, %v923
    %v926 = vsub.f32 %v916, %v924
    %v927 = vmul.f32 %v925, %v925
    %v928 = vmul.f32 %v926, %v926
    %v929 = vsel %vm200, %v927, 0.0
    %930 = vadd.xlane.f32.xlu0 %v929
    %v931 = vpop.xlane.xlu0 %930
    %v932 = vsel %vm200, %v928, 0.0
    %933 = vadd.xlane.f32.xlu0 %v932
    %v934 = vpop.xlane.xlu0 %933
    %v935 = vmul.f32 %v931, %v207
    %v936 = vmul.f32 %v934, %v207
    %v937 = vadd.f32 %v935, 1e-05
    %v938 = vadd.f32 %v936, 1e-05
    %v939 = vrsqrt.pop %v937
    %v940 = vrsqrt.pop %v938
    %v941 = vmul.f32 %v925, %v939
    %v942 = vmul.f32 %v926, %v940
    %v943 = vlaneseq
    %v944 = vshrl.u32 %v943, 7
    %v945 = vsub.s32 1, %v944
    %v946 = vrot.slane %v242, %v945
    %v947 = vmul.f32 %v941, %v946
    %v948 = vmul.f32 %v942, %v946
    %v949 = vlaneseq
    %v950 = vshrl.u32 %v949, 7
    %v951 = vsub.s32 2, %v950
    %v952 = vrot.slane %v242, %v951
    %v953 = vadd.f32 %v947, %v952
    %v954 = vadd.f32 %v948, %v952
    %v955 = vld [vmem:[%s8] sm:$0xff]
    %v956 = vld [vmem:[%s8 + $0x8] sm:$0xff]
    %v957 = vld [vmem:[%s8 + $0x10] sm:$0xff]
    %v958 = vld [vmem:[%s8 + $0x18] sm:$0xff]
    %v959 = vld [vmem:[%s9] sm:$0x1]
    %v961 = vlaneseq
    %v962 = vshrl.u32 %v961, 7
    %v963 = vsub.s32 0, %v962
    %v964 = vrot.slane %v959, %v963
    %v967 = vsel %vm200, %v953, 0
    %v970 = vsel %vm200, %v954, 0
    %972 = vmatprep.subr.mxu0 0.0
    %973 = vmatpush1.msra.mxu0 0.0
    %974 = vmatprep.subr.mxu0 0.0
    %975 = vmatpush1.msra.mxu0 0.0
    %976 = vmatprep.subr.mxu0 0.0
    %977 = vmatpush1.msra.mxu0 0.0
    %978 = vmatprep.subr.mxu0 0.0
    %979 = vmatpush1.msra.mxu0 0.0
    %980 = vmatprep.subr.mxu0 0.0
    %981 = vmatpush1.msra.mxu0 0.0
    %982 = vmatprep.subr.mxu0 0.0
    %983 = vmatpush1.msra.mxu0 0.0
    %984 = vmatprep.subr.mxu0 0.0
    %985 = vmatpush1.msra.mxu0 0.0
    %986 = vmatprep.subr.mxu0 0.0
    %987 = vmatpush1.msra.mxu0 0.0
    %988 = vmatprep.subr.mxu0 0.0
    %989 = vmatpush1.msra.mxu0 0.0
    %990 = vmatprep.subr.mxu0 0.0
    %991 = vmatpush1.msra.mxu0 0.0
    %992 = vmatprep.subr.mxu0 0.0
    %993 = vmatpush1.msra.mxu0 0.0
    %994 = vmatprep.subr.mxu0 0.0
    %995 = vmatpush1.msra.mxu0 0.0
    %996 = vmatprep.subr.mxu0 0.0
    %997 = vmatpush1.msra.mxu0 %v958
    %998 = vmatprep.subr.mxu0 0.0
    %999 = vmatpush1.msra.mxu0 %v957
    %1000 = vmatprep.subr.mxu0 0.0
    %1001 = vmatpush1.msra.mxu0 %v956
    %1002 = vmatprep.subr.mxu0 0.0
    %1003 = vmatpush1.msra.mxu0 %v955
    %1004 = vmatprep.subr.mxu0 0.0
    %1005 = vmatpush2.msra.mxu0 0.0
    %1006 = vmatprep.subr.mxu0 0.0
    %1007 = vmatpush2.msra.mxu0 0.0
    %1008 = vmatprep.subr.mxu0 0.0
    %1009 = vmatpush2.msra.mxu0 0.0
    %1010 = vmatprep.subr.mxu0 0.0
    %1011 = vmatpush2.msra.mxu0 0.0
    %1012 = vmatprep.subr.mxu0 0.0
    %1013 = vmatpush2.msra.mxu0 0.0
    %1014 = vmatprep.subr.mxu0 0.0
    %1015 = vmatpush2.msra.mxu0 0.0
    %1016 = vmatprep.subr.mxu0 0.0
    %1017 = vmatpush2.msra.mxu0 0.0
    %1018 = vmatprep.subr.mxu0 0.0
    %1019 = vmatpush2.msra.mxu0 0.0
    %1020 = vmatprep.subr.mxu0 0.0
    %1021 = vmatpush2.msra.mxu0 0.0
    %1022 = vmatprep.subr.mxu0 0.0
    %1023 = vmatpush2.msra.mxu0 0.0
    %1024 = vmatprep.subr.mxu0 0.0
    %1025 = vmatpush2.msra.mxu0 0.0
    %1026 = vmatprep.subr.mxu0 0.0
    %1027 = vmatpush2.msra.mxu0 0.0
    %1028 = vmatprep.subr.mxu0 0.0
    %1029 = vmatpush2.msra.mxu0 0.0
    %1030 = vmatprep.subr.mxu0 0.0
    %1031 = vmatpush2.msra.mxu0 0.0
    %1032 = vmatprep.subr.mxu0 0.0
    %1033 = vmatpush2.msra.mxu0 0.0
    %1034 = vmatprep.subr.mxu0 0.0
    %1035 = vmatpush2.msra.mxu0 0.0
    %1036 = vmatprep.mubr.f32.mxu0 0.0
    %1037 = vmatmul.mubr.f32.gmra.mxu0 %v967
    %v1038 = vpop.f32.mrf.mxu0
    %v1039 = vadd.f32 %v964, %v1038
    %v1040 = vpop.f32.mrf.mxu0
    %1041 = vmatprep.mubr.f32.mxu0 0.0
    %1042 = vmatmul.mubr.f32.gmra.mxu0 %v970
    %v1043 = vpop.f32.mrf.mxu0
    %v1044 = vadd.f32 %v964, %v1043
    %v1045 = vpop.f32.mrf.mxu0
    %1046 = vdwg.mxu0
    %v1047 = vmul.f32 %v1039, 0.5
    %v1048 = vmul.f32 %v1044, 0.5
    %v1049 = vmul.f32 %v1039, 0.044715
    %v1050 = vmul.f32 %v1044, 0.044715
    %v1051 = vmul.f32 %v1049, %v1039
    %v1052 = vmul.f32 %v1050, %v1044
    %v1053 = vmul.f32 %v1051, %v1039
    %v1054 = vmul.f32 %v1052, %v1044
    %v1055 = vadd.f32 %v1039, %v1053
    %v1056 = vadd.f32 %v1044, %v1054
    %v1057 = vmul.f32 %v1055, 0.7978846
    %v1058 = vmul.f32 %v1056, 0.7978846
    %v1059 = vtanh.pop %v1057
    %v1060 = vtanh.pop %v1058
    %v1061 = vadd.f32 %v1059, 1.0
    %v1062 = vadd.f32 %v1060, 1.0
    %v1063 = vmul.f32 %v1047, %v1061
    %v1064 = vmul.f32 %v1048, %v1062
    %v1065 = vld [vmem:[%s10] sm:$0xff]
    %v1066 = vld [vmem:[%s10 + $0x8] sm:$0xff]
    %v1067 = vld [vmem:[%s10 + $0x10] sm:$0xff]
    %v1068 = vld [vmem:[%s10 + $0x18] sm:$0xff]
    %v1069 = vld [vmem:[%s10 + $0x20] sm:$0xff]
    %v1070 = vld [vmem:[%s10 + $0x28] sm:$0xff]
    %v1071 = vld [vmem:[%s10 + $0x30] sm:$0xff]
    %v1072 = vld [vmem:[%s10 + $0x38] sm:$0xff]
    %v1073 = vlaneseq
    %v1074 = vshrl.u32 %v1073, 7
    %v1075 = vsub.s32 3, %v1074
    %v1076 = vrot.slane %v242, %v1075
    %vm1077 = vcmask 523264
    %v1079 = vsel %vm1077, %v1063, 0
    %v1082 = vsel %vm1077, %v1064, 0
    %1084 = vmatprep.subr.mxu0 0.0
    %1085 = vmatpush1.msra.mxu0 0.0
    %1086 = vmatprep.subr.mxu0 0.0
    %1087 = vmatpush1.msra.mxu0 0.0
    %1088 = vmatprep.subr.mxu0 0.0
    %1089 = vmatpush1.msra.mxu0 0.0
    %1090 = vmatprep.subr.mxu0 0.0
    %1091 = vmatpush1.msra.mxu0 0.0
    %1092 = vmatprep.subr.mxu0 0.0
    %1093 = vmatpush1.msra.mxu0 0.0
    %1094 = vmatprep.subr.mxu0 0.0
    %1095 = vmatpush1.msra.mxu0 0.0
    %1096 = vmatprep.subr.mxu0 0.0
    %1097 = vmatpush1.msra.mxu0 0.0
    %1098 = vmatprep.subr.mxu0 0.0
    %1099 = vmatpush1.msra.mxu0 0.0
    %1100 = vmatprep.subr.mxu0 0.0
    %1101 = vmatpush1.msra.mxu0 %v1072
    %1102 = vmatprep.subr.mxu0 0.0
    %1103 = vmatpush1.msra.mxu0 %v1071
    %1104 = vmatprep.subr.mxu0 0.0
    %1105 = vmatpush1.msra.mxu0 %v1070
    %1106 = vmatprep.subr.mxu0 0.0
    %1107 = vmatpush1.msra.mxu0 %v1069
    %1108 = vmatprep.subr.mxu0 0.0
    %1109 = vmatpush1.msra.mxu0 %v1068
    %1110 = vmatprep.subr.mxu0 0.0
    %1111 = vmatpush1.msra.mxu0 %v1067
    %1112 = vmatprep.subr.mxu0 0.0
    %1113 = vmatpush1.msra.mxu0 %v1066
    %1114 = vmatprep.subr.mxu0 0.0
    %1115 = vmatpush1.msra.mxu0 %v1065
    %1116 = vmatprep.subr.mxu0 0.0
    %1117 = vmatpush2.msra.mxu0 0.0
    %1118 = vmatprep.subr.mxu0 0.0
    %1119 = vmatpush2.msra.mxu0 0.0
    %1120 = vmatprep.subr.mxu0 0.0
    %1121 = vmatpush2.msra.mxu0 0.0
    %1122 = vmatprep.subr.mxu0 0.0
    %1123 = vmatpush2.msra.mxu0 0.0
    %1124 = vmatprep.subr.mxu0 0.0
    %1125 = vmatpush2.msra.mxu0 0.0
    %1126 = vmatprep.subr.mxu0 0.0
    %1127 = vmatpush2.msra.mxu0 0.0
    %1128 = vmatprep.subr.mxu0 0.0
    %1129 = vmatpush2.msra.mxu0 0.0
    %1130 = vmatprep.subr.mxu0 0.0
    %1131 = vmatpush2.msra.mxu0 0.0
    %1132 = vmatprep.subr.mxu0 0.0
    %1133 = vmatpush2.msra.mxu0 0.0
    %1134 = vmatprep.subr.mxu0 0.0
    %1135 = vmatpush2.msra.mxu0 0.0
    %1136 = vmatprep.subr.mxu0 0.0
    %1137 = vmatpush2.msra.mxu0 0.0
    %1138 = vmatprep.subr.mxu0 0.0
    %1139 = vmatpush2.msra.mxu0 0.0
    %1140 = vmatprep.subr.mxu0 0.0
    %1141 = vmatpush2.msra.mxu0 0.0
    %1142 = vmatprep.subr.mxu0 0.0
    %1143 = vmatpush2.msra.mxu0 0.0
    %1144 = vmatprep.subr.mxu0 0.0
    %1145 = vmatpush2.msra.mxu0 0.0
    %1146 = vmatprep.subr.mxu0 0.0
    %1147 = vmatpush2.msra.mxu0 0.0
    %1148 = vmatprep.mubr.f32.mxu0 0.0
    %1149 = vmatmul.mubr.f32.gmra.mxu0 %v1079
    %v1150 = vpop.f32.mrf.mxu0
    %v1151 = vadd.f32 %v1076, %v1150
    %v1152 = vpop.f32.mrf.mxu0
    %1153 = vmatprep.mubr.f32.mxu0 0.0
    %1154 = vmatmul.mubr.f32.gmra.mxu0 %v1082
    %v1155 = vpop.f32.mrf.mxu0
    %v1156 = vadd.f32 %v1076, %v1155
    %v1157 = vpop.f32.mrf.mxu0
    %1158 = vdwg.mxu0
    %v1159 = vadd.f32 %v953, %v1151
    %v1160 = vadd.f32 %v954, %v1156
    %v1161 = vsel %vm200, %v1159, 0.0
    %1162 = vadd.xlane.f32.xlu0 %v1161
    %v1163 = vpop.xlane.xlu0 %1162
    %v1164 = vsel %vm200, %v1160, 0.0
    %1165 = vadd.xlane.f32.xlu0 %v1164
    %v1166 = vpop.xlane.xlu0 %1165
    %v1167 = vmul.f32 %v1163, %v207
    %v1168 = vmul.f32 %v1166, %v207
    %v1169 = vsub.f32 %v1159, %v1167
    %v1170 = vsub.f32 %v1160, %v1168
    %v1171 = vmul.f32 %v1169, %v1169
    %v1172 = vmul.f32 %v1170, %v1170
    %v1173 = vsel %vm200, %v1171, 0.0
    %1174 = vadd.xlane.f32.xlu0 %v1173
    %v1175 = vpop.xlane.xlu0 %1174
    %v1176 = vsel %vm200, %v1172, 0.0
    %1177 = vadd.xlane.f32.xlu0 %v1176
    %v1178 = vpop.xlane.xlu0 %1177
    %v1179 = vmul.f32 %v1175, %v207
    %v1180 = vmul.f32 %v1178, %v207
    %v1181 = vadd.f32 %v1179, 1e-05
    %v1182 = vadd.f32 %v1180, 1e-05
    %v1183 = vrsqrt.pop %v1181
    %v1184 = vrsqrt.pop %v1182
    %v1185 = vmul.f32 %v1169, %v1183
    %v1186 = vmul.f32 %v1170, %v1184
    %v1187 = vlaneseq
    %v1188 = vshrl.u32 %v1187, 7
    %v1189 = vsub.s32 4, %v1188
    %v1190 = vrot.slane %v242, %v1189
    %v1191 = vmul.f32 %v1185, %v1190
    %v1192 = vmul.f32 %v1186, %v1190
    %v1193 = vlaneseq
    %v1194 = vshrl.u32 %v1193, 7
    %v1195 = vsub.s32 5, %v1194
    %v1196 = vrot.slane %v242, %v1195
    %v1197 = vadd.f32 %v1191, %v1196
    %v1198 = vadd.f32 %v1192, %v1196
    %s1199 = scalar_lea.vmem %s11, 8
    %v1200 = vld [vmem:[%s1199] sm:$0x3f]
    %s1201 = scalar_lea.vmem %s5, 32
    %v1202 = vld [vmem:[%s1201] sm:$0xff]
    %v1203 = vld [vmem:[%s1201 + $0x8] sm:$0xff]
    %v1204 = vld [vmem:[%s1201 + $0x10] sm:$0xff]
    %v1205 = vld [vmem:[%s1201 + $0x18] sm:$0xff]
    %s1206 = scalar_lea.vmem %s6, 1
    %v1207 = vld [vmem:[%s1206] sm:$0x1]
    %v1209 = vlaneseq
    %v1210 = vshrl.u32 %v1209, 7
    %v1211 = vsub.s32 0, %v1210
    %v1212 = vrot.slane %v1207, %v1211
    %v1215 = vsel %vm200, %v1197, 0
    %v1218 = vsel %vm200, %v1198, 0
    %1220 = vmatprep.subr.mxu0 0.0
    %1221 = vmatpush1.msra.mxu0 0.0
    %1222 = vmatprep.subr.mxu0 0.0
    %1223 = vmatpush1.msra.mxu0 0.0
    %1224 = vmatprep.subr.mxu0 0.0
    %1225 = vmatpush1.msra.mxu0 0.0
    %1226 = vmatprep.subr.mxu0 0.0
    %1227 = vmatpush1.msra.mxu0 0.0
    %1228 = vmatprep.subr.mxu0 0.0
    %1229 = vmatpush1.msra.mxu0 0.0
    %1230 = vmatprep.subr.mxu0 0.0
    %1231 = vmatpush1.msra.mxu0 0.0
    %1232 = vmatprep.subr.mxu0 0.0
    %1233 = vmatpush1.msra.mxu0 0.0
    %1234 = vmatprep.subr.mxu0 0.0
    %1235 = vmatpush1.msra.mxu0 0.0
    %1236 = vmatprep.subr.mxu0 0.0
    %1237 = vmatpush1.msra.mxu0 0.0
    %1238 = vmatprep.subr.mxu0 0.0
    %1239 = vmatpush1.msra.mxu0 0.0
    %1240 = vmatprep.subr.mxu0 0.0
    %1241 = vmatpush1.msra.mxu0 0.0
    %1242 = vmatprep.subr.mxu0 0.0
    %1243 = vmatpush1.msra.mxu0 0.0
    %1244 = vmatprep.subr.mxu0 0.0
    %1245 = vmatpush1.msra.mxu0 %v1205
    %1246 = vmatprep.subr.mxu0 0.0
    %1247 = vmatpush1.msra.mxu0 %v1204
    %1248 = vmatprep.subr.mxu0 0.0
    %1249 = vmatpush1.msra.mxu0 %v1203
    %1250 = vmatprep.subr.mxu0 0.0
    %1251 = vmatpush1.msra.mxu0 %v1202
    %1252 = vmatprep.subr.mxu0 0.0
    %1253 = vmatpush2.msra.mxu0 0.0
    %1254 = vmatprep.subr.mxu0 0.0
    %1255 = vmatpush2.msra.mxu0 0.0
    %1256 = vmatprep.subr.mxu0 0.0
    %1257 = vmatpush2.msra.mxu0 0.0
    %1258 = vmatprep.subr.mxu0 0.0
    %1259 = vmatpush2.msra.mxu0 0.0
    %1260 = vmatprep.subr.mxu0 0.0
    %1261 = vmatpush2.msra.mxu0 0.0
    %1262 = vmatprep.subr.mxu0 0.0
    %1263 = vmatpush2.msra.mxu0 0.0
    %1264 = vmatprep.subr.mxu0 0.0
    %1265 = vmatpush2.msra.mxu0 0.0
    %1266 = vmatprep.subr.mxu0 0.0
    %1267 = vmatpush2.msra.mxu0 0.0
    %1268 = vmatprep.subr.mxu0 0.0
    %1269 = vmatpush2.msra.mxu0 0.0
    %1270 = vmatprep.subr.mxu0 0.0
    %1271 = vmatpush2.msra.mxu0 0.0
    %1272 = vmatprep.subr.mxu0 0.0
    %1273 = vmatpush2.msra.mxu0 0.0
    %1274 = vmatprep.subr.mxu0 0.0
    %1275 = vmatpush2.msra.mxu0 0.0
    %1276 = vmatprep.subr.mxu0 0.0
    %1277 = vmatpush2.msra.mxu0 0.0
    %1278 = vmatprep.subr.mxu0 0.0
    %1279 = vmatpush2.msra.mxu0 0.0
    %1280 = vmatprep.subr.mxu0 0.0
    %1281 = vmatpush2.msra.mxu0 0.0
    %1282 = vmatprep.subr.mxu0 0.0
    %1283 = vmatpush2.msra.mxu0 0.0
    %1284 = vmatprep.mubr.f32.mxu0 0.0
    %1285 = vmatmul.mubr.f32.gmra.mxu0 %v1215
    %v1286 = vpop.f32.mrf.mxu0
    %v1287 = vadd.f32 %v1212, %v1286
    %v1288 = vpop.f32.mrf.mxu0
    %1289 = vmatprep.mubr.f32.mxu0 0.0
    %1290 = vmatmul.mubr.f32.gmra.mxu0 %v1218
    %v1291 = vpop.f32.mrf.mxu0
    %v1292 = vadd.f32 %v1212, %v1291
    %v1293 = vpop.f32.mrf.mxu0
    %1294 = vdwg.mxu0
    %1297 = vrot.lane.b32.xlu0 %v1287, 96
    %v1298 = vpop.permute.xlu0 %1297
    %1299 = vrot.lane.b32.xlu0 %v1292, 96
    %v1300 = vpop.permute.xlu0 %1299
    %v1301 = vsel %vm341, %v1287, 0
    %v1303 = vsel %vm341, %v1292, 0
    %v1305 = vsel %vm341, %v1298, 0
    %v1307 = vsel %vm341, %v1300, 0
    %1309 = vmatprep.subr.mxu0 0.0
    %1310 = vmatpush1.xpose.msra.mxu0 0.0
    %1311 = vmatprep.subr.mxu0 0.0
    %1312 = vmatpush1.xpose.msra.mxu0 0.0
    %1313 = vmatprep.subr.mxu0 0.0
    %1314 = vmatpush1.xpose.msra.mxu0 0.0
    %1315 = vmatprep.subr.mxu0 0.0
    %1316 = vmatpush1.xpose.msra.mxu0 0.0
    %1317 = vmatprep.subr.mxu0 0.0
    %1318 = vmatpush1.xpose.msra.mxu0 0.0
    %1319 = vmatprep.subr.mxu0 0.0
    %1320 = vmatpush1.xpose.msra.mxu0 0.0
    %1321 = vmatprep.subr.mxu0 0.0
    %1322 = vmatpush1.xpose.msra.mxu0 0.0
    %1323 = vmatprep.subr.mxu0 0.0
    %1324 = vmatpush1.xpose.msra.mxu0 0.0
    %1325 = vmatprep.subr.mxu0 0.0
    %1326 = vmatpush1.xpose.msra.mxu0 0.0
    %1327 = vmatprep.subr.mxu0 0.0
    %1328 = vmatpush1.xpose.msra.mxu0 0.0
    %1329 = vmatprep.subr.mxu0 0.0
    %1330 = vmatpush1.xpose.msra.mxu0 0.0
    %1331 = vmatprep.subr.mxu0 0.0
    %1332 = vmatpush1.xpose.msra.mxu0 0.0
    %1333 = vmatprep.subr.mxu0 0.0
    %1334 = vmatpush1.xpose.msra.mxu0 0.0
    %1335 = vmatprep.subr.mxu0 0.0
    %1336 = vmatpush1.xpose.msra.mxu0 0.0
    %1337 = vmatprep.subr.mxu0 0.0
    %1338 = vmatpush1.xpose.msra.mxu0 %v1307
    %1339 = vmatprep.subr.mxu0 0.0
    %1340 = vmatpush1.xpose.msra.mxu0 %v1305
    %1341 = vmatprep.subr.mxu0 0.0
    %1342 = vmatpush2.xpose.msra.mxu0 0.0
    %1343 = vmatprep.subr.mxu0 0.0
    %1344 = vmatpush2.xpose.msra.mxu0 0.0
    %1345 = vmatprep.subr.mxu0 0.0
    %1346 = vmatpush2.xpose.msra.mxu0 0.0
    %1347 = vmatprep.subr.mxu0 0.0
    %1348 = vmatpush2.xpose.msra.mxu0 0.0
    %1349 = vmatprep.subr.mxu0 0.0
    %1350 = vmatpush2.xpose.msra.mxu0 0.0
    %1351 = vmatprep.subr.mxu0 0.0
    %1352 = vmatpush2.xpose.msra.mxu0 0.0
    %1353 = vmatprep.subr.mxu0 0.0
    %1354 = vmatpush2.xpose.msra.mxu0 0.0
    %1355 = vmatprep.subr.mxu0 0.0
    %1356 = vmatpush2.xpose.msra.mxu0 0.0
    %1357 = vmatprep.subr.mxu0 0.0
    %1358 = vmatpush2.xpose.msra.mxu0 0.0
    %1359 = vmatprep.subr.mxu0 0.0
    %1360 = vmatpush2.xpose.msra.mxu0 0.0
    %1361 = vmatprep.subr.mxu0 0.0
    %1362 = vmatpush2.xpose.msra.mxu0 0.0
    %1363 = vmatprep.subr.mxu0 0.0
    %1364 = vmatpush2.xpose.msra.mxu0 0.0
    %1365 = vmatprep.subr.mxu0 0.0
    %1366 = vmatpush2.xpose.msra.mxu0 0.0
    %1367 = vmatprep.subr.mxu0 0.0
    %1368 = vmatpush2.xpose.msra.mxu0 0.0
    %1369 = vmatprep.subr.mxu0 0.0
    %1370 = vmatpush2.xpose.msra.mxu0 0.0
    %1371 = vmatprep.subr.mxu0 0.0
    %1372 = vmatpush2.xpose.msra.mxu0 0.0
    %1373 = vmatprep.mubr.f32.mxu0 0.0
    %1374 = vmatmul.mubr.f32.gmra.mxu0 %v1301
    %v1375 = vpop.f32.mrf.mxu0
    %v1376 = vadd.f32 0.0, %v1375
    %v1377 = vpop.f32.mrf.mxu0
    %1378 = vmatprep.mubr.f32.mxu0 0.0
    %1379 = vmatmul.mubr.f32.gmra.mxu0 %v1303
    %v1380 = vpop.f32.mrf.mxu0
    %v1381 = vadd.f32 0.0, %v1380
    %v1382 = vpop.f32.mrf.mxu0
    %1383 = vdwg.mxu0
    %v1384 = vmul.f32 %v1376, 0.25
    %v1385 = vmul.f32 %v1381, 0.25
    %v1386 = vadd.f32 %v1384, %v240
    %v1387 = vadd.f32 %v1385, %v241
    %v1388 = vsel %vm341, %v1386, -inf
    %1389 = vmax.xlane.f32.xlu0 %v1388
    %v1390 = vpop.xlane.xlu0 %1389
    %v1391 = vsel %vm341, %v1387, -inf
    %1392 = vmax.xlane.f32.xlu0 %v1391
    %v1393 = vpop.xlane.xlu0 %1392
    %v1394 = vsub.f32 %v1386, %v1390
    %v1395 = vsub.f32 %v1387, %v1393
    %v1396 = vmul.f32 %v1394, 1.442695
    %v1397 = vpow.pop %v1396
    %v1398 = vmul.f32 %v1395, 1.442695
    %v1399 = vpow.pop %v1398
    %v1400 = vsel %vm341, %v1397, 0.0
    %1401 = vadd.xlane.f32.xlu0 %v1400
    %v1402 = vpop.xlane.xlu0 %1401
    %v1403 = vsel %vm341, %v1399, 0.0
    %1404 = vadd.xlane.f32.xlu0 %v1403
    %v1405 = vpop.xlane.xlu0 %1404
    %v1406 = vrcp.pop %v1402
    %v1407 = vrcp.pop %v1405
    %v1408 = vmul.f32 %v1397, %v1406
    %v1409 = vmul.f32 %v1399, %v1407
    %1410 = vrot.lane.b32.xlu0 %v1287, 64
    %v1411 = vpop.permute.xlu0 %1410
    %1412 = vrot.lane.b32.xlu0 %v1292, 64
    %v1413 = vpop.permute.xlu0 %1412
    %v1417 = vsel %vm341, %v1408, 0
    %v1420 = vsel %vm341, %v1409, 0
    %1422 = vmatprep.subr.mxu0 0.0
    %1423 = vmatpush1.msra.mxu0 0.0
    %1424 = vmatprep.subr.mxu0 0.0
    %1425 = vmatpush1.msra.mxu0 0.0
    %1426 = vmatprep.subr.mxu0 0.0
    %1427 = vmatpush1.msra.mxu0 0.0
    %1428 = vmatprep.subr.mxu0 0.0
    %1429 = vmatpush1.msra.mxu0 0.0
    %1430 = vmatprep.subr.mxu0 0.0
    %1431 = vmatpush1.msra.mxu0 0.0
    %1432 = vmatprep.subr.mxu0 0.0
    %1433 = vmatpush1.msra.mxu0 0.0
    %1434 = vmatprep.subr.mxu0 0.0
    %1435 = vmatpush1.msra.mxu0 0.0
    %1436 = vmatprep.subr.mxu0 0.0
    %1437 = vmatpush1.msra.mxu0 0.0
    %1438 = vmatprep.subr.mxu0 0.0
    %1439 = vmatpush1.msra.mxu0 0.0
    %1440 = vmatprep.subr.mxu0 0.0
    %1441 = vmatpush1.msra.mxu0 0.0
    %1442 = vmatprep.subr.mxu0 0.0
    %1443 = vmatpush1.msra.mxu0 0.0
    %1444 = vmatprep.subr.mxu0 0.0
    %1445 = vmatpush1.msra.mxu0 0.0
    %1446 = vmatprep.subr.mxu0 0.0
    %1447 = vmatpush1.msra.mxu0 0.0
    %1448 = vmatprep.subr.mxu0 0.0
    %1449 = vmatpush1.msra.mxu0 0.0
    %1450 = vmatprep.subr.mxu0 0.0
    %1451 = vmatpush1.msra.mxu0 %v1413
    %1452 = vmatprep.subr.mxu0 0.0
    %1453 = vmatpush1.msra.mxu0 %v1411
    %1454 = vmatprep.subr.mxu0 0.0
    %1455 = vmatpush2.msra.mxu0 0.0
    %1456 = vmatprep.subr.mxu0 0.0
    %1457 = vmatpush2.msra.mxu0 0.0
    %1458 = vmatprep.subr.mxu0 0.0
    %1459 = vmatpush2.msra.mxu0 0.0
    %1460 = vmatprep.subr.mxu0 0.0
    %1461 = vmatpush2.msra.mxu0 0.0
    %1462 = vmatprep.subr.mxu0 0.0
    %1463 = vmatpush2.msra.mxu0 0.0
    %1464 = vmatprep.subr.mxu0 0.0
    %1465 = vmatpush2.msra.mxu0 0.0
    %1466 = vmatprep.subr.mxu0 0.0
    %1467 = vmatpush2.msra.mxu0 0.0
    %1468 = vmatprep.subr.mxu0 0.0
    %1469 = vmatpush2.msra.mxu0 0.0
    %1470 = vmatprep.subr.mxu0 0.0
    %1471 = vmatpush2.msra.mxu0 0.0
    %1472 = vmatprep.subr.mxu0 0.0
    %1473 = vmatpush2.msra.mxu0 0.0
    %1474 = vmatprep.subr.mxu0 0.0
    %1475 = vmatpush2.msra.mxu0 0.0
    %1476 = vmatprep.subr.mxu0 0.0
    %1477 = vmatpush2.msra.mxu0 0.0
    %1478 = vmatprep.subr.mxu0 0.0
    %1479 = vmatpush2.msra.mxu0 0.0
    %1480 = vmatprep.subr.mxu0 0.0
    %1481 = vmatpush2.msra.mxu0 0.0
    %1482 = vmatprep.subr.mxu0 0.0
    %1483 = vmatpush2.msra.mxu0 0.0
    %1484 = vmatprep.subr.mxu0 0.0
    %1485 = vmatpush2.msra.mxu0 0.0
    %1486 = vmatprep.mubr.f32.mxu0 0.0
    %1487 = vmatmul.mubr.f32.gmra.mxu0 %v1417
    %v1488 = vpop.f32.mrf.mxu0
    %v1489 = vadd.f32 0.0, %v1488
    %v1490 = vpop.f32.mrf.mxu0
    %1491 = vmatprep.mubr.f32.mxu0 0.0
    %1492 = vmatmul.mubr.f32.gmra.mxu0 %v1420
    %v1493 = vpop.f32.mrf.mxu0
    %v1494 = vadd.f32 0.0, %v1493
    %v1495 = vpop.f32.mrf.mxu0
    %1496 = vdwg.mxu0
    %s1497 = scalar_lea.vmem %s7, 32
    %v1498 = vld [vmem:[%s1497] sm:$0xff]
    %v1499 = vld [vmem:[%s1497 + $0x8] sm:$0xff]
    %1500 = vrot.lane.b32.xlu0 %v1287, 112
    %v1501 = vpop.permute.xlu0 %1500
    %1502 = vrot.lane.b32.xlu0 %v1292, 112
    %v1503 = vpop.permute.xlu0 %1502
    %1504 = vrot.lane.b32.xlu0 %v1287, 80
    %v1505 = vpop.permute.xlu0 %1504
    %1506 = vrot.lane.b32.xlu0 %v1292, 80
    %v1507 = vpop.permute.xlu0 %1506
    %v1508 = vsel %vm341, %v1501, 0
    %v1510 = vsel %vm341, %v1503, 0
    %v1512 = vsel %vm341, %v1505, 0
    %v1514 = vsel %vm341, %v1507, 0
    %1516 = vmatprep.subr.mxu0 0.0
    %1517 = vmatpush1.xpose.msra.mxu0 0.0
    %1518 = vmatprep.subr.mxu0 0.0
    %1519 = vmatpush1.xpose.msra.mxu0 0.0
    %1520 = vmatprep.subr.mxu0 0.0
    %1521 = vmatpush1.xpose.msra.mxu0 0.0
    %1522 = vmatprep.subr.mxu0 0.0
    %1523 = vmatpush1.xpose.msra.mxu0 0.0
    %1524 = vmatprep.subr.mxu0 0.0
    %1525 = vmatpush1.xpose.msra.mxu0 0.0
    %1526 = vmatprep.subr.mxu0 0.0
    %1527 = vmatpush1.xpose.msra.mxu0 0.0
    %1528 = vmatprep.subr.mxu0 0.0
    %1529 = vmatpush1.xpose.msra.mxu0 0.0
    %1530 = vmatprep.subr.mxu0 0.0
    %1531 = vmatpush1.xpose.msra.mxu0 0.0
    %1532 = vmatprep.subr.mxu0 0.0
    %1533 = vmatpush1.xpose.msra.mxu0 0.0
    %1534 = vmatprep.subr.mxu0 0.0
    %1535 = vmatpush1.xpose.msra.mxu0 0.0
    %1536 = vmatprep.subr.mxu0 0.0
    %1537 = vmatpush1.xpose.msra.mxu0 0.0
    %1538 = vmatprep.subr.mxu0 0.0
    %1539 = vmatpush1.xpose.msra.mxu0 0.0
    %1540 = vmatprep.subr.mxu0 0.0
    %1541 = vmatpush1.xpose.msra.mxu0 0.0
    %1542 = vmatprep.subr.mxu0 0.0
    %1543 = vmatpush1.xpose.msra.mxu0 0.0
    %1544 = vmatprep.subr.mxu0 0.0
    %1545 = vmatpush1.xpose.msra.mxu0 %v1514
    %1546 = vmatprep.subr.mxu0 0.0
    %1547 = vmatpush1.xpose.msra.mxu0 %v1512
    %1548 = vmatprep.subr.mxu0 0.0
    %1549 = vmatpush2.xpose.msra.mxu0 0.0
    %1550 = vmatprep.subr.mxu0 0.0
    %1551 = vmatpush2.xpose.msra.mxu0 0.0
    %1552 = vmatprep.subr.mxu0 0.0
    %1553 = vmatpush2.xpose.msra.mxu0 0.0
    %1554 = vmatprep.subr.mxu0 0.0
    %1555 = vmatpush2.xpose.msra.mxu0 0.0
    %1556 = vmatprep.subr.mxu0 0.0
    %1557 = vmatpush2.xpose.msra.mxu0 0.0
    %1558 = vmatprep.subr.mxu0 0.0
    %1559 = vmatpush2.xpose.msra.mxu0 0.0
    %1560 = vmatprep.subr.mxu0 0.0
    %1561 = vmatpush2.xpose.msra.mxu0 0.0
    %1562 = vmatprep.subr.mxu0 0.0
    %1563 = vmatpush2.xpose.msra.mxu0 0.0
    %1564 = vmatprep.subr.mxu0 0.0
    %1565 = vmatpush2.xpose.msra.mxu0 0.0
    %1566 = vmatprep.subr.mxu0 0.0
    %1567 = vmatpush2.xpose.msra.mxu0 0.0
    %1568 = vmatprep.subr.mxu0 0.0
    %1569 = vmatpush2.xpose.msra.mxu0 0.0
    %1570 = vmatprep.subr.mxu0 0.0
    %1571 = vmatpush2.xpose.msra.mxu0 0.0
    %1572 = vmatprep.subr.mxu0 0.0
    %1573 = vmatpush2.xpose.msra.mxu0 0.0
    %1574 = vmatprep.subr.mxu0 0.0
    %1575 = vmatpush2.xpose.msra.mxu0 0.0
    %1576 = vmatprep.subr.mxu0 0.0
    %1577 = vmatpush2.xpose.msra.mxu0 0.0
    %1578 = vmatprep.subr.mxu0 0.0
    %1579 = vmatpush2.xpose.msra.mxu0 0.0
    %1580 = vmatprep.mubr.f32.mxu0 0.0
    %1581 = vmatmul.mubr.f32.gmra.mxu0 %v1508
    %v1582 = vpop.f32.mrf.mxu0
    %v1583 = vadd.f32 0.0, %v1582
    %v1584 = vpop.f32.mrf.mxu0
    %1585 = vmatprep.mubr.f32.mxu0 0.0
    %1586 = vmatmul.mubr.f32.gmra.mxu0 %v1510
    %v1587 = vpop.f32.mrf.mxu0
    %v1588 = vadd.f32 0.0, %v1587
    %v1589 = vpop.f32.mrf.mxu0
    %1590 = vdwg.mxu0
    %v1591 = vmul.f32 %v1583, 0.25
    %v1592 = vmul.f32 %v1588, 0.25
    %v1593 = vadd.f32 %v1591, %v240
    %v1594 = vadd.f32 %v1592, %v241
    %v1595 = vsel %vm341, %v1593, -inf
    %1596 = vmax.xlane.f32.xlu0 %v1595
    %v1597 = vpop.xlane.xlu0 %1596
    %v1598 = vsel %vm341, %v1594, -inf
    %1599 = vmax.xlane.f32.xlu0 %v1598
    %v1600 = vpop.xlane.xlu0 %1599
    %v1601 = vsub.f32 %v1593, %v1597
    %v1602 = vsub.f32 %v1594, %v1600
    %v1603 = vmul.f32 %v1601, 1.442695
    %v1604 = vpow.pop %v1603
    %v1605 = vmul.f32 %v1602, 1.442695
    %v1606 = vpow.pop %v1605
    %v1607 = vsel %vm341, %v1604, 0.0
    %1608 = vadd.xlane.f32.xlu0 %v1607
    %v1609 = vpop.xlane.xlu0 %1608
    %v1610 = vsel %vm341, %v1606, 0.0
    %1611 = vadd.xlane.f32.xlu0 %v1610
    %v1612 = vpop.xlane.xlu0 %1611
    %v1613 = vrcp.pop %v1609
    %v1614 = vrcp.pop %v1612
    %v1615 = vmul.f32 %v1604, %v1613
    %v1616 = vmul.f32 %v1606, %v1614
    %1617 = vrot.lane.b32.xlu0 %v1287, 48
    %v1618 = vpop.permute.xlu0 %1617
    %1619 = vrot.lane.b32.xlu0 %v1292, 48
    %v1620 = vpop.permute.xlu0 %1619
    %v1624 = vsel %vm341, %v1615, 0
    %v1627 = vsel %vm341, %v1616, 0
    %1629 = vmatprep.subr.mxu0 0.0
    %1630 = vmatpush1.msra.mxu0 0.0
    %1631 = vmatprep.subr.mxu0 0.0
    %1632 = vmatpush1.msra.mxu0 0.0
    %1633 = vmatprep.subr.mxu0 0.0
    %1634 = vmatpush1.msra.mxu0 0.0
    %1635 = vmatprep.subr.mxu0 0.0
    %1636 = vmatpush1.msra.mxu0 0.0
    %1637 = vmatprep.subr.mxu0 0.0
    %1638 = vmatpush1.msra.mxu0 0.0
    %1639 = vmatprep.subr.mxu0 0.0
    %1640 = vmatpush1.msra.mxu0 0.0
    %1641 = vmatprep.subr.mxu0 0.0
    %1642 = vmatpush1.msra.mxu0 0.0
    %1643 = vmatprep.subr.mxu0 0.0
    %1644 = vmatpush1.msra.mxu0 0.0
    %1645 = vmatprep.subr.mxu0 0.0
    %1646 = vmatpush1.msra.mxu0 0.0
    %1647 = vmatprep.subr.mxu0 0.0
    %1648 = vmatpush1.msra.mxu0 0.0
    %1649 = vmatprep.subr.mxu0 0.0
    %1650 = vmatpush1.msra.mxu0 0.0
    %1651 = vmatprep.subr.mxu0 0.0
    %1652 = vmatpush1.msra.mxu0 0.0
    %1653 = vmatprep.subr.mxu0 0.0
    %1654 = vmatpush1.msra.mxu0 0.0
    %1655 = vmatprep.subr.mxu0 0.0
    %1656 = vmatpush1.msra.mxu0 0.0
    %1657 = vmatprep.subr.mxu0 0.0
    %1658 = vmatpush1.msra.mxu0 %v1620
    %1659 = vmatprep.subr.mxu0 0.0
    %1660 = vmatpush1.msra.mxu0 %v1618
    %1661 = vmatprep.subr.mxu0 0.0
    %1662 = vmatpush2.msra.mxu0 0.0
    %1663 = vmatprep.subr.mxu0 0.0
    %1664 = vmatpush2.msra.mxu0 0.0
    %1665 = vmatprep.subr.mxu0 0.0
    %1666 = vmatpush2.msra.mxu0 0.0
    %1667 = vmatprep.subr.mxu0 0.0
    %1668 = vmatpush2.msra.mxu0 0.0
    %1669 = vmatprep.subr.mxu0 0.0
    %1670 = vmatpush2.msra.mxu0 0.0
    %1671 = vmatprep.subr.mxu0 0.0
    %1672 = vmatpush2.msra.mxu0 0.0
    %1673 = vmatprep.subr.mxu0 0.0
    %1674 = vmatpush2.msra.mxu0 0.0
    %1675 = vmatprep.subr.mxu0 0.0
    %1676 = vmatpush2.msra.mxu0 0.0
    %1677 = vmatprep.subr.mxu0 0.0
    %1678 = vmatpush2.msra.mxu0 0.0
    %1679 = vmatprep.subr.mxu0 0.0
    %1680 = vmatpush2.msra.mxu0 0.0
    %1681 = vmatprep.subr.mxu0 0.0
    %1682 = vmatpush2.msra.mxu0 0.0
    %1683 = vmatprep.subr.mxu0 0.0
    %1684 = vmatpush2.msra.mxu0 0.0
    %1685 = vmatprep.subr.mxu0 0.0
    %1686 = vmatpush2.msra.mxu0 0.0
    %1687 = vmatprep.subr.mxu0 0.0
    %1688 = vmatpush2.msra.mxu0 0.0
    %1689 = vmatprep.subr.mxu0 0.0
    %1690 = vmatpush2.msra.mxu0 0.0
    %1691 = vmatprep.subr.mxu0 0.0
    %1692 = vmatpush2.msra.mxu0 0.0
    %1693 = vmatprep.mubr.f32.mxu0 0.0
    %1694 = vmatmul.mubr.f32.gmra.mxu0 %v1624
    %v1695 = vpop.f32.mrf.mxu0
    %v1696 = vadd.f32 0.0, %v1695
    %v1697 = vpop.f32.mrf.mxu0
    %1698 = vmatprep.mubr.f32.mxu0 0.0
    %1699 = vmatmul.mubr.f32.gmra.mxu0 %v1627
    %v1700 = vpop.f32.mrf.mxu0
    %v1701 = vadd.f32 0.0, %v1700
    %v1702 = vpop.f32.mrf.mxu0
    %1703 = vdwg.mxu0
    %s1704 = scalar_lea.vmem %s7, 48
    %v1705 = vld [vmem:[%s1704] sm:$0xff]
    %v1706 = vld [vmem:[%s1704 + $0x8] sm:$0xff]
    %v1708 = vsel %vm341, %v1696, 0
    %v1711 = vsel %vm341, %v1701, 0
    %1713 = vmatprep.subr.mxu0 0.0
    %1714 = vmatpush1.msra.mxu0 0.0
    %1715 = vmatprep.subr.mxu0 0.0
    %1716 = vmatpush1.msra.mxu0 0.0
    %1717 = vmatprep.subr.mxu0 0.0
    %1718 = vmatpush1.msra.mxu0 0.0
    %1719 = vmatprep.subr.mxu0 0.0
    %1720 = vmatpush1.msra.mxu0 0.0
    %1721 = vmatprep.subr.mxu0 0.0
    %1722 = vmatpush1.msra.mxu0 0.0
    %1723 = vmatprep.subr.mxu0 0.0
    %1724 = vmatpush1.msra.mxu0 0.0
    %1725 = vmatprep.subr.mxu0 0.0
    %1726 = vmatpush1.msra.mxu0 0.0
    %1727 = vmatprep.subr.mxu0 0.0
    %1728 = vmatpush1.msra.mxu0 0.0
    %1729 = vmatprep.subr.mxu0 0.0
    %1730 = vmatpush1.msra.mxu0 0.0
    %1731 = vmatprep.subr.mxu0 0.0
    %1732 = vmatpush1.msra.mxu0 0.0
    %1733 = vmatprep.subr.mxu0 0.0
    %1734 = vmatpush1.msra.mxu0 0.0
    %1735 = vmatprep.subr.mxu0 0.0
    %1736 = vmatpush1.msra.mxu0 0.0
    %1737 = vmatprep.subr.mxu0 0.0
    %1738 = vmatpush1.msra.mxu0 0.0
    %1739 = vmatprep.subr.mxu0 0.0
    %1740 = vmatpush1.msra.mxu0 0.0
    %1741 = vmatprep.subr.mxu0 0.0
    %1742 = vmatpush1.msra.mxu0 %v1706
    %1743 = vmatprep.subr.mxu0 0.0
    %1744 = vmatpush1.msra.mxu0 %v1705
    %1745 = vmatprep.subr.mxu0 0.0
    %1746 = vmatpush2.msra.mxu0 0.0
    %1747 = vmatprep.subr.mxu0 0.0
    %1748 = vmatpush2.msra.mxu0 0.0
    %1749 = vmatprep.subr.mxu0 0.0
    %1750 = vmatpush2.msra.mxu0 0.0
    %1751 = vmatprep.subr.mxu0 0.0
    %1752 = vmatpush2.msra.mxu0 0.0
    %1753 = vmatprep.subr.mxu0 0.0
    %1754 = vmatpush2.msra.mxu0 0.0
    %1755 = vmatprep.subr.mxu0 0.0
    %1756 = vmatpush2.msra.mxu0 0.0
    %1757 = vmatprep.subr.mxu0 0.0
    %1758 = vmatpush2.msra.mxu0 0.0
    %1759 = vmatprep.subr.mxu0 0.0
    %1760 = vmatpush2.msra.mxu0 0.0
    %1761 = vmatprep.subr.mxu0 0.0
    %1762 = vmatpush2.msra.mxu0 0.0
    %1763 = vmatprep.subr.mxu0 0.0
    %1764 = vmatpush2.msra.mxu0 0.0
    %1765 = vmatprep.subr.mxu0 0.0
    %1766 = vmatpush2.msra.mxu0 0.0
    %1767 = vmatprep.subr.mxu0 0.0
    %1768 = vmatpush2.msra.mxu0 0.0
    %1769 = vmatprep.subr.mxu0 0.0
    %1770 = vmatpush2.msra.mxu0 0.0
    %1771 = vmatprep.subr.mxu0 0.0
    %1772 = vmatpush2.msra.mxu0 0.0
    %1773 = vmatprep.subr.mxu0 0.0
    %1774 = vmatpush2.msra.mxu0 0.0
    %1775 = vmatprep.subr.mxu0 0.0
    %1776 = vmatpush2.msra.mxu0 0.0
    %1777 = vmatprep.mubr.f32.mxu0 0.0
    %1778 = vmatmul.mubr.f32.gmra.mxu0 %v1708
    %v1779 = vpop.f32.mrf.mxu0
    %v1780 = vadd.f32 0.0, %v1779
    %v1781 = vpop.f32.mrf.mxu0
    %1782 = vmatprep.mubr.f32.mxu0 0.0
    %1783 = vmatmul.mubr.f32.gmra.mxu0 %v1711
    %v1784 = vpop.f32.mrf.mxu0
    %v1785 = vadd.f32 0.0, %v1784
    %v1786 = vpop.f32.mrf.mxu0
    %1787 = vdwg.mxu0
    %v1789 = vsel %vm341, %v1489, 0
    %v1792 = vsel %vm341, %v1494, 0
    %1794 = vmatprep.subr.mxu0 0.0
    %1795 = vmatpush1.msra.mxu0 0.0
    %1796 = vmatprep.subr.mxu0 0.0
    %1797 = vmatpush1.msra.mxu0 0.0
    %1798 = vmatprep.subr.mxu0 0.0
    %1799 = vmatpush1.msra.mxu0 0.0
    %1800 = vmatprep.subr.mxu0 0.0
    %1801 = vmatpush1.msra.mxu0 0.0
    %1802 = vmatprep.subr.mxu0 0.0
    %1803 = vmatpush1.msra.mxu0 0.0
    %1804 = vmatprep.subr.mxu0 0.0
    %1805 = vmatpush1.msra.mxu0 0.0
    %1806 = vmatprep.subr.mxu0 0.0
    %1807 = vmatpush1.msra.mxu0 0.0
    %1808 = vmatprep.subr.mxu0 0.0
    %1809 = vmatpush1.msra.mxu0 0.0
    %1810 = vmatprep.subr.mxu0 0.0
    %1811 = vmatpush1.msra.mxu0 0.0
    %1812 = vmatprep.subr.mxu0 0.0
    %1813 = vmatpush1.msra.mxu0 0.0
    %1814 = vmatprep.subr.mxu0 0.0
    %1815 = vmatpush1.msra.mxu0 0.0
    %1816 = vmatprep.subr.mxu0 0.0
    %1817 = vmatpush1.msra.mxu0 0.0
    %1818 = vmatprep.subr.mxu0 0.0
    %1819 = vmatpush1.msra.mxu0 0.0
    %1820 = vmatprep.subr.mxu0 0.0
    %1821 = vmatpush1.msra.mxu0 0.0
    %1822 = vmatprep.subr.mxu0 0.0
    %1823 = vmatpush1.msra.mxu0 %v1499
    %1824 = vmatprep.subr.mxu0 0.0
    %1825 = vmatpush1.msra.mxu0 %v1498
    %1826 = vmatprep.subr.mxu0 0.0
    %1827 = vmatpush2.msra.mxu0 0.0
    %1828 = vmatprep.subr.mxu0 0.0
    %1829 = vmatpush2.msra.mxu0 0.0
    %1830 = vmatprep.subr.mxu0 0.0
    %1831 = vmatpush2.msra.mxu0 0.0
    %1832 = vmatprep.subr.mxu0 0.0
    %1833 = vmatpush2.msra.mxu0 0.0
    %1834 = vmatprep.subr.mxu0 0.0
    %1835 = vmatpush2.msra.mxu0 0.0
    %1836 = vmatprep.subr.mxu0 0.0
    %1837 = vmatpush2.msra.mxu0 0.0
    %1838 = vmatprep.subr.mxu0 0.0
    %1839 = vmatpush2.msra.mxu0 0.0
    %1840 = vmatprep.subr.mxu0 0.0
    %1841 = vmatpush2.msra.mxu0 0.0
    %1842 = vmatprep.subr.mxu0 0.0
    %1843 = vmatpush2.msra.mxu0 0.0
    %1844 = vmatprep.subr.mxu0 0.0
    %1845 = vmatpush2.msra.mxu0 0.0
    %1846 = vmatprep.subr.mxu0 0.0
    %1847 = vmatpush2.msra.mxu0 0.0
    %1848 = vmatprep.subr.mxu0 0.0
    %1849 = vmatpush2.msra.mxu0 0.0
    %1850 = vmatprep.subr.mxu0 0.0
    %1851 = vmatpush2.msra.mxu0 0.0
    %1852 = vmatprep.subr.mxu0 0.0
    %1853 = vmatpush2.msra.mxu0 0.0
    %1854 = vmatprep.subr.mxu0 0.0
    %1855 = vmatpush2.msra.mxu0 0.0
    %1856 = vmatprep.subr.mxu0 0.0
    %1857 = vmatpush2.msra.mxu0 0.0
    %1858 = vmatprep.mubr.f32.mxu0 0.0
    %1859 = vmatmul.mubr.f32.gmra.mxu0 %v1789
    %v1860 = vpop.f32.mrf.mxu0
    %v1861 = vadd.f32 %v1780, %v1860
    %v1862 = vpop.f32.mrf.mxu0
    %1863 = vmatprep.mubr.f32.mxu0 0.0
    %1864 = vmatmul.mubr.f32.gmra.mxu0 %v1792
    %v1865 = vpop.f32.mrf.mxu0
    %v1866 = vadd.f32 %v1785, %v1865
    %v1867 = vpop.f32.mrf.mxu0
    %1868 = vdwg.mxu0
    %v1869 = vlaneseq
    %v1870 = vshrl.u32 %v1869, 7
    %v1871 = vsub.s32 0, %v1870
    %v1872 = vrot.slane %v1200, %v1871
    %v1873 = vadd.f32 %v1861, %v1872
    %v1874 = vadd.f32 %v1866, %v1872
    %v1875 = vadd.f32 %v1197, %v1873
    %v1876 = vadd.f32 %v1198, %v1874
    %v1877 = vsel %vm200, %v1875, 0.0
    %1878 = vadd.xlane.f32.xlu0 %v1877
    %v1879 = vpop.xlane.xlu0 %1878
    %v1880 = vsel %vm200, %v1876, 0.0
    %1881 = vadd.xlane.f32.xlu0 %v1880
    %v1882 = vpop.xlane.xlu0 %1881
    %v1883 = vmul.f32 %v1879, %v207
    %v1884 = vmul.f32 %v1882, %v207
    %v1885 = vsub.f32 %v1875, %v1883
    %v1886 = vsub.f32 %v1876, %v1884
    %v1887 = vmul.f32 %v1885, %v1885
    %v1888 = vmul.f32 %v1886, %v1886
    %v1889 = vsel %vm200, %v1887, 0.0
    %1890 = vadd.xlane.f32.xlu0 %v1889
    %v1891 = vpop.xlane.xlu0 %1890
    %v1892 = vsel %vm200, %v1888, 0.0
    %1893 = vadd.xlane.f32.xlu0 %v1892
    %v1894 = vpop.xlane.xlu0 %1893
    %v1895 = vmul.f32 %v1891, %v207
    %v1896 = vmul.f32 %v1894, %v207
    %v1897 = vadd.f32 %v1895, 1e-05
    %v1898 = vadd.f32 %v1896, 1e-05
    %v1899 = vrsqrt.pop %v1897
    %v1900 = vrsqrt.pop %v1898
    %v1901 = vmul.f32 %v1885, %v1899
    %v1902 = vmul.f32 %v1886, %v1900
    %v1903 = vlaneseq
    %v1904 = vshrl.u32 %v1903, 7
    %v1905 = vsub.s32 1, %v1904
    %v1906 = vrot.slane %v1200, %v1905
    %v1907 = vmul.f32 %v1901, %v1906
    %v1908 = vmul.f32 %v1902, %v1906
    %v1909 = vlaneseq
    %v1910 = vshrl.u32 %v1909, 7
    %v1911 = vsub.s32 2, %v1910
    %v1912 = vrot.slane %v1200, %v1911
    %v1913 = vadd.f32 %v1907, %v1912
    %v1914 = vadd.f32 %v1908, %v1912
    %s1915 = scalar_lea.vmem %s8, 32
    %v1916 = vld [vmem:[%s1915] sm:$0xff]
    %v1917 = vld [vmem:[%s1915 + $0x8] sm:$0xff]
    %v1918 = vld [vmem:[%s1915 + $0x10] sm:$0xff]
    %v1919 = vld [vmem:[%s1915 + $0x18] sm:$0xff]
    %s1920 = scalar_lea.vmem %s9, 1
    %v1921 = vld [vmem:[%s1920] sm:$0x1]
    %v1923 = vlaneseq
    %v1924 = vshrl.u32 %v1923, 7
    %v1925 = vsub.s32 0, %v1924
    %v1926 = vrot.slane %v1921, %v1925
    %v1929 = vsel %vm200, %v1913, 0
    %v1932 = vsel %vm200, %v1914, 0
    %1934 = vmatprep.subr.mxu0 0.0
    %1935 = vmatpush1.msra.mxu0 0.0
    %1936 = vmatprep.subr.mxu0 0.0
    %1937 = vmatpush1.msra.mxu0 0.0
    %1938 = vmatprep.subr.mxu0 0.0
    %1939 = vmatpush1.msra.mxu0 0.0
    %1940 = vmatprep.subr.mxu0 0.0
    %1941 = vmatpush1.msra.mxu0 0.0
    %1942 = vmatprep.subr.mxu0 0.0
    %1943 = vmatpush1.msra.mxu0 0.0
    %1944 = vmatprep.subr.mxu0 0.0
    %1945 = vmatpush1.msra.mxu0 0.0
    %1946 = vmatprep.subr.mxu0 0.0
    %1947 = vmatpush1.msra.mxu0 0.0
    %1948 = vmatprep.subr.mxu0 0.0
    %1949 = vmatpush1.msra.mxu0 0.0
    %1950 = vmatprep.subr.mxu0 0.0
    %1951 = vmatpush1.msra.mxu0 0.0
    %1952 = vmatprep.subr.mxu0 0.0
    %1953 = vmatpush1.msra.mxu0 0.0
    %1954 = vmatprep.subr.mxu0 0.0
    %1955 = vmatpush1.msra.mxu0 0.0
    %1956 = vmatprep.subr.mxu0 0.0
    %1957 = vmatpush1.msra.mxu0 0.0
    %1958 = vmatprep.subr.mxu0 0.0
    %1959 = vmatpush1.msra.mxu0 %v1919
    %1960 = vmatprep.subr.mxu0 0.0
    %1961 = vmatpush1.msra.mxu0 %v1918
    %1962 = vmatprep.subr.mxu0 0.0
    %1963 = vmatpush1.msra.mxu0 %v1917
    %1964 = vmatprep.subr.mxu0 0.0
    %1965 = vmatpush1.msra.mxu0 %v1916
    %1966 = vmatprep.subr.mxu0 0.0
    %1967 = vmatpush2.msra.mxu0 0.0
    %1968 = vmatprep.subr.mxu0 0.0
    %1969 = vmatpush2.msra.mxu0 0.0
    %1970 = vmatprep.subr.mxu0 0.0
    %1971 = vmatpush2.msra.mxu0 0.0
    %1972 = vmatprep.subr.mxu0 0.0
    %1973 = vmatpush2.msra.mxu0 0.0
    %1974 = vmatprep.subr.mxu0 0.0
    %1975 = vmatpush2.msra.mxu0 0.0
    %1976 = vmatprep.subr.mxu0 0.0
    %1977 = vmatpush2.msra.mxu0 0.0
    %1978 = vmatprep.subr.mxu0 0.0
    %1979 = vmatpush2.msra.mxu0 0.0
    %1980 = vmatprep.subr.mxu0 0.0
    %1981 = vmatpush2.msra.mxu0 0.0
    %1982 = vmatprep.subr.mxu0 0.0
    %1983 = vmatpush2.msra.mxu0 0.0
    %1984 = vmatprep.subr.mxu0 0.0
    %1985 = vmatpush2.msra.mxu0 0.0
    %1986 = vmatprep.subr.mxu0 0.0
    %1987 = vmatpush2.msra.mxu0 0.0
    %1988 = vmatprep.subr.mxu0 0.0
    %1989 = vmatpush2.msra.mxu0 0.0
    %1990 = vmatprep.subr.mxu0 0.0
    %1991 = vmatpush2.msra.mxu0 0.0
    %1992 = vmatprep.subr.mxu0 0.0
    %1993 = vmatpush2.msra.mxu0 0.0
    %1994 = vmatprep.subr.mxu0 0.0
    %1995 = vmatpush2.msra.mxu0 0.0
    %1996 = vmatprep.subr.mxu0 0.0
    %1997 = vmatpush2.msra.mxu0 0.0
    %1998 = vmatprep.mubr.f32.mxu0 0.0
    %1999 = vmatmul.mubr.f32.gmra.mxu0 %v1929
    %v2000 = vpop.f32.mrf.mxu0
    %v2001 = vadd.f32 %v1926, %v2000
    %v2002 = vpop.f32.mrf.mxu0
    %2003 = vmatprep.mubr.f32.mxu0 0.0
    %2004 = vmatmul.mubr.f32.gmra.mxu0 %v1932
    %v2005 = vpop.f32.mrf.mxu0
    %v2006 = vadd.f32 %v1926, %v2005
    %v2007 = vpop.f32.mrf.mxu0
    %2008 = vdwg.mxu0
    %v2009 = vmul.f32 %v2001, 0.5
    %v2010 = vmul.f32 %v2006, 0.5
    %v2011 = vmul.f32 %v2001, 0.044715
    %v2012 = vmul.f32 %v2006, 0.044715
    %v2013 = vmul.f32 %v2011, %v2001
    %v2014 = vmul.f32 %v2012, %v2006
    %v2015 = vmul.f32 %v2013, %v2001
    %v2016 = vmul.f32 %v2014, %v2006
    %v2017 = vadd.f32 %v2001, %v2015
    %v2018 = vadd.f32 %v2006, %v2016
    %v2019 = vmul.f32 %v2017, 0.7978846
    %v2020 = vmul.f32 %v2018, 0.7978846
    %v2021 = vtanh.pop %v2019
    %v2022 = vtanh.pop %v2020
    %v2023 = vadd.f32 %v2021, 1.0
    %v2024 = vadd.f32 %v2022, 1.0
    %v2025 = vmul.f32 %v2009, %v2023
    %v2026 = vmul.f32 %v2010, %v2024
    %s2027 = scalar_lea.vmem %s10, 64
    %v2028 = vld [vmem:[%s2027] sm:$0xff]
    %v2029 = vld [vmem:[%s2027 + $0x8] sm:$0xff]
    %v2030 = vld [vmem:[%s2027 + $0x10] sm:$0xff]
    %v2031 = vld [vmem:[%s2027 + $0x18] sm:$0xff]
    %v2032 = vld [vmem:[%s2027 + $0x20] sm:$0xff]
    %v2033 = vld [vmem:[%s2027 + $0x28] sm:$0xff]
    %v2034 = vld [vmem:[%s2027 + $0x30] sm:$0xff]
    %v2035 = vld [vmem:[%s2027 + $0x38] sm:$0xff]
    %v2036 = vlaneseq
    %v2037 = vshrl.u32 %v2036, 7
    %v2038 = vsub.s32 3, %v2037
    %v2039 = vrot.slane %v1200, %v2038
    %v2041 = vsel %vm1077, %v2025, 0
    %v2044 = vsel %vm1077, %v2026, 0
    %2046 = vmatprep.subr.mxu0 0.0
    %2047 = vmatpush1.msra.mxu0 0.0
    %2048 = vmatprep.subr.mxu0 0.0
    %2049 = vmatpush1.msra.mxu0 0.0
    %2050 = vmatprep.subr.mxu0 0.0
    %2051 = vmatpush1.msra.mxu0 0.0
    %2052 = vmatprep.subr.mxu0 0.0
    %2053 = vmatpush1.msra.mxu0 0.0
    %2054 = vmatprep.subr.mxu0 0.0
    %2055 = vmatpush1.msra.mxu0 0.0
    %2056 = vmatprep.subr.mxu0 0.0
    %2057 = vmatpush1.msra.mxu0 0.0
    %2058 = vmatprep.subr.mxu0 0.0
    %2059 = vmatpush1.msra.mxu0 0.0
    %2060 = vmatprep.subr.mxu0 0.0
    %2061 = vmatpush1.msra.mxu0 0.0
    %2062 = vmatprep.subr.mxu0 0.0
    %2063 = vmatpush1.msra.mxu0 %v2035
    %2064 = vmatprep.subr.mxu0 0.0
    %2065 = vmatpush1.msra.mxu0 %v2034
    %2066 = vmatprep.subr.mxu0 0.0
    %2067 = vmatpush1.msra.mxu0 %v2033
    %2068 = vmatprep.subr.mxu0 0.0
    %2069 = vmatpush1.msra.mxu0 %v2032
    %2070 = vmatprep.subr.mxu0 0.0
    %2071 = vmatpush1.msra.mxu0 %v2031
    %2072 = vmatprep.subr.mxu0 0.0
    %2073 = vmatpush1.msra.mxu0 %v2030
    %2074 = vmatprep.subr.mxu0 0.0
    %2075 = vmatpush1.msra.mxu0 %v2029
    %2076 = vmatprep.subr.mxu0 0.0
    %2077 = vmatpush1.msra.mxu0 %v2028
    %2078 = vmatprep.subr.mxu0 0.0
    %2079 = vmatpush2.msra.mxu0 0.0
    %2080 = vmatprep.subr.mxu0 0.0
    %2081 = vmatpush2.msra.mxu0 0.0
    %2082 = vmatprep.subr.mxu0 0.0
    %2083 = vmatpush2.msra.mxu0 0.0
    %2084 = vmatprep.subr.mxu0 0.0
    %2085 = vmatpush2.msra.mxu0 0.0
    %2086 = vmatprep.subr.mxu0 0.0
    %2087 = vmatpush2.msra.mxu0 0.0
    %2088 = vmatprep.subr.mxu0 0.0
    %2089 = vmatpush2.msra.mxu0 0.0
    %2090 = vmatprep.subr.mxu0 0.0
    %2091 = vmatpush2.msra.mxu0 0.0
    %2092 = vmatprep.subr.mxu0 0.0
    %2093 = vmatpush2.msra.mxu0 0.0
    %2094 = vmatprep.subr.mxu0 0.0
    %2095 = vmatpush2.msra.mxu0 0.0
    %2096 = vmatprep.subr.mxu0 0.0
    %2097 = vmatpush2.msra.mxu0 0.0
    %2098 = vmatprep.subr.mxu0 0.0
    %2099 = vmatpush2.msra.mxu0 0.0
    %2100 = vmatprep.subr.mxu0 0.0
    %2101 = vmatpush2.msra.mxu0 0.0
    %2102 = vmatprep.subr.mxu0 0.0
    %2103 = vmatpush2.msra.mxu0 0.0
    %2104 = vmatprep.subr.mxu0 0.0
    %2105 = vmatpush2.msra.mxu0 0.0
    %2106 = vmatprep.subr.mxu0 0.0
    %2107 = vmatpush2.msra.mxu0 0.0
    %2108 = vmatprep.subr.mxu0 0.0
    %2109 = vmatpush2.msra.mxu0 0.0
    %2110 = vmatprep.mubr.f32.mxu0 0.0
    %2111 = vmatmul.mubr.f32.gmra.mxu0 %v2041
    %v2112 = vpop.f32.mrf.mxu0
    %v2113 = vadd.f32 %v2039, %v2112
    %v2114 = vpop.f32.mrf.mxu0
    %2115 = vmatprep.mubr.f32.mxu0 0.0
    %2116 = vmatmul.mubr.f32.gmra.mxu0 %v2044
    %v2117 = vpop.f32.mrf.mxu0
    %v2118 = vadd.f32 %v2039, %v2117
    %v2119 = vpop.f32.mrf.mxu0
    %2120 = vdwg.mxu0
    %v2121 = vadd.f32 %v1913, %v2113
    %v2122 = vadd.f32 %v1914, %v2118
    %v2123 = vsel %vm200, %v2121, 0.0
    %2124 = vadd.xlane.f32.xlu0 %v2123
    %v2125 = vpop.xlane.xlu0 %2124
    %v2126 = vsel %vm200, %v2122, 0.0
    %2127 = vadd.xlane.f32.xlu0 %v2126
    %v2128 = vpop.xlane.xlu0 %2127
    %v2129 = vmul.f32 %v2125, %v207
    %v2130 = vmul.f32 %v2128, %v207
    %v2131 = vsub.f32 %v2121, %v2129
    %v2132 = vsub.f32 %v2122, %v2130
    %v2133 = vmul.f32 %v2131, %v2131
    %v2134 = vmul.f32 %v2132, %v2132
    %v2135 = vsel %vm200, %v2133, 0.0
    %2136 = vadd.xlane.f32.xlu0 %v2135
    %v2137 = vpop.xlane.xlu0 %2136
    %v2138 = vsel %vm200, %v2134, 0.0
    %2139 = vadd.xlane.f32.xlu0 %v2138
    %v2140 = vpop.xlane.xlu0 %2139
    %v2141 = vmul.f32 %v2137, %v207
    %v2142 = vmul.f32 %v2140, %v207
    %v2143 = vadd.f32 %v2141, 1e-05
    %v2144 = vadd.f32 %v2142, 1e-05
    %v2145 = vrsqrt.pop %v2143
    %v2146 = vrsqrt.pop %v2144
    %v2147 = vmul.f32 %v2131, %v2145
    %v2148 = vmul.f32 %v2132, %v2146
    %v2149 = vlaneseq
    %v2150 = vshrl.u32 %v2149, 7
    %v2151 = vsub.s32 4, %v2150
    %v2152 = vrot.slane %v1200, %v2151
    %v2153 = vmul.f32 %v2147, %v2152
    %v2154 = vmul.f32 %v2148, %v2152
    %v2155 = vlaneseq
    %v2156 = vshrl.u32 %v2155, 7
    %v2157 = vsub.s32 5, %v2156
    %v2158 = vrot.slane %v1200, %v2157
    %v2159 = vadd.f32 %v2153, %v2158
    %v2160 = vadd.f32 %v2154, %v2158
    %v2161 = vlaneseq
    %v2162 = vshrl.u32 %v2161, 7
    %v2163 = vmul.u32 %v2162, 8
    %vm2164 = vcmp.eq.s32.totalorder %v90, %v2163
    %v2165 = vsel %vm2164, 1, 0
    %v2166 = vcvt.s32.f32 %v2165
    %v2168 = vsel %vm341, %v2166, 0
    %2170 = vmatprep.subr.mxu0 0.0
    %2171 = vmatpush1.msra.mxu0 0.0
    %2172 = vmatprep.subr.mxu0 0.0
    %2173 = vmatpush1.msra.mxu0 0.0
    %2174 = vmatprep.subr.mxu0 0.0
    %2175 = vmatpush1.msra.mxu0 0.0
    %2176 = vmatprep.subr.mxu0 0.0
    %2177 = vmatpush1.msra.mxu0 0.0
    %2178 = vmatprep.subr.mxu0 0.0
    %2179 = vmatpush1.msra.mxu0 0.0
    %2180 = vmatprep.subr.mxu0 0.0
    %2181 = vmatpush1.msra.mxu0 0.0
    %2182 = vmatprep.subr.mxu0 0.0
    %2183 = vmatpush1.msra.mxu0 0.0
    %2184 = vmatprep.subr.mxu0 0.0
    %2185 = vmatpush1.msra.mxu0 0.0
    %2186 = vmatprep.subr.mxu0 0.0
    %2187 = vmatpush1.msra.mxu0 0.0
    %2188 = vmatprep.subr.mxu0 0.0
    %2189 = vmatpush1.msra.mxu0 0.0
    %2190 = vmatprep.subr.mxu0 0.0
    %2191 = vmatpush1.msra.mxu0 0.0
    %2192 = vmatprep.subr.mxu0 0.0
    %2193 = vmatpush1.msra.mxu0 0.0
    %2194 = vmatprep.subr.mxu0 0.0
    %2195 = vmatpush1.msra.mxu0 0.0
    %2196 = vmatprep.subr.mxu0 0.0
    %2197 = vmatpush1.msra.mxu0 0.0
    %2198 = vmatprep.subr.mxu0 0.0
    %2199 = vmatpush1.msra.mxu0 %v2160
    %2200 = vmatprep.subr.mxu0 0.0
    %2201 = vmatpush1.msra.mxu0 %v2159
    %2202 = vmatprep.subr.mxu0 0.0
    %2203 = vmatpush2.msra.mxu0 0.0
    %2204 = vmatprep.subr.mxu0 0.0
    %2205 = vmatpush2.msra.mxu0 0.0
    %2206 = vmatprep.subr.mxu0 0.0
    %2207 = vmatpush2.msra.mxu0 0.0
    %2208 = vmatprep.subr.mxu0 0.0
    %2209 = vmatpush2.msra.mxu0 0.0
    %2210 = vmatprep.subr.mxu0 0.0
    %2211 = vmatpush2.msra.mxu0 0.0
    %2212 = vmatprep.subr.mxu0 0.0
    %2213 = vmatpush2.msra.mxu0 0.0
    %2214 = vmatprep.subr.mxu0 0.0
    %2215 = vmatpush2.msra.mxu0 0.0
    %2216 = vmatprep.subr.mxu0 0.0
    %2217 = vmatpush2.msra.mxu0 0.0
    %2218 = vmatprep.subr.mxu0 0.0
    %2219 = vmatpush2.msra.mxu0 0.0
    %2220 = vmatprep.subr.mxu0 0.0
    %2221 = vmatpush2.msra.mxu0 0.0
    %2222 = vmatprep.subr.mxu0 0.0
    %2223 = vmatpush2.msra.mxu0 0.0
    %2224 = vmatprep.subr.mxu0 0.0
    %2225 = vmatpush2.msra.mxu0 0.0
    %2226 = vmatprep.subr.mxu0 0.0
    %2227 = vmatpush2.msra.mxu0 0.0
    %2228 = vmatprep.subr.mxu0 0.0
    %2229 = vmatpush2.msra.mxu0 0.0
    %2230 = vmatprep.subr.mxu0 0.0
    %2231 = vmatpush2.msra.mxu0 0.0
    %2232 = vmatprep.subr.mxu0 0.0
    %2233 = vmatpush2.msra.mxu0 0.0
    %2234 = vmatprep.mubr.f32.mxu0 0.0
    %2235 = vmatmul.mubr.f32.gmra.mxu0 %v2168
    %v2236 = vpop.f32.mrf.mxu0
    %v2237 = vadd.f32 0.0, %v2236
    %v2238 = vpop.f32.mrf.mxu0
    %2239 = vdwg.mxu0
    %v2240 = vld [vmem:[%s12] sm:$0xff]
    %v2241 = vld [vmem:[%s12 + $0x8] sm:$0xff]
    %v2242 = vld [vmem:[%s12 + $0x10] sm:$0xff]
    %v2243 = vld [vmem:[%s12 + $0x18] sm:$0xff]
    %v2244 = vld [vmem:[%s13] sm:$0x1]
    %v2246 = vlaneseq
    %v2247 = vshrl.u32 %v2246, 7
    %v2248 = vsub.s32 0, %v2247
    %v2249 = vrot.slane %v2244, %v2248
    %v2252 = vsel %vm200, %v2237, 0
    %2254 = vmatprep.subr.mxu0 0.0
    %2255 = vmatpush1.msra.mxu0 0.0
    %2256 = vmatprep.subr.mxu0 0.0
    %2257 = vmatpush1.msra.mxu0 0.0
    %2258 = vmatprep.subr.mxu0 0.0
    %2259 = vmatpush1.msra.mxu0 0.0
    %2260 = vmatprep.subr.mxu0 0.0
    %2261 = vmatpush1.msra.mxu0 0.0
    %2262 = vmatprep.subr.mxu0 0.0
    %2263 = vmatpush1.msra.mxu0 0.0
    %2264 = vmatprep.subr.mxu0 0.0
    %2265 = vmatpush1.msra.mxu0 0.0
    %2266 = vmatprep.subr.mxu0 0.0
    %2267 = vmatpush1.msra.mxu0 0.0
    %2268 = vmatprep.subr.mxu0 0.0
    %2269 = vmatpush1.msra.mxu0 0.0
    %2270 = vmatprep.subr.mxu0 0.0
    %2271 = vmatpush1.msra.mxu0 0.0
    %2272 = vmatprep.subr.mxu0 0.0
    %2273 = vmatpush1.msra.mxu0 0.0
    %2274 = vmatprep.subr.mxu0 0.0
    %2275 = vmatpush1.msra.mxu0 0.0
    %2276 = vmatprep.subr.mxu0 0.0
    %2277 = vmatpush1.msra.mxu0 0.0
    %2278 = vmatprep.subr.mxu0 0.0
    %2279 = vmatpush1.msra.mxu0 %v2243
    %2280 = vmatprep.subr.mxu0 0.0
    %2281 = vmatpush1.msra.mxu0 %v2242
    %2282 = vmatprep.subr.mxu0 0.0
    %2283 = vmatpush1.msra.mxu0 %v2241
    %2284 = vmatprep.subr.mxu0 0.0
    %2285 = vmatpush1.msra.mxu0 %v2240
    %2286 = vmatprep.subr.mxu0 0.0
    %2287 = vmatpush2.msra.mxu0 0.0
    %2288 = vmatprep.subr.mxu0 0.0
    %2289 = vmatpush2.msra.mxu0 0.0
    %2290 = vmatprep.subr.mxu0 0.0
    %2291 = vmatpush2.msra.mxu0 0.0
    %2292 = vmatprep.subr.mxu0 0.0
    %2293 = vmatpush2.msra.mxu0 0.0
    %2294 = vmatprep.subr.mxu0 0.0
    %2295 = vmatpush2.msra.mxu0 0.0
    %2296 = vmatprep.subr.mxu0 0.0
    %2297 = vmatpush2.msra.mxu0 0.0
    %2298 = vmatprep.subr.mxu0 0.0
    %2299 = vmatpush2.msra.mxu0 0.0
    %2300 = vmatprep.subr.mxu0 0.0
    %2301 = vmatpush2.msra.mxu0 0.0
    %2302 = vmatprep.subr.mxu0 0.0
    %2303 = vmatpush2.msra.mxu0 0.0
    %2304 = vmatprep.subr.mxu0 0.0
    %2305 = vmatpush2.msra.mxu0 0.0
    %2306 = vmatprep.subr.mxu0 0.0
    %2307 = vmatpush2.msra.mxu0 0.0
    %2308 = vmatprep.subr.mxu0 0.0
    %2309 = vmatpush2.msra.mxu0 0.0
    %2310 = vmatprep.subr.mxu0 0.0
    %2311 = vmatpush2.msra.mxu0 0.0
    %2312 = vmatprep.subr.mxu0 0.0
    %2313 = vmatpush2.msra.mxu0 0.0
    %2314 = vmatprep.subr.mxu0 0.0
    %2315 = vmatpush2.msra.mxu0 0.0
    %2316 = vmatprep.subr.mxu0 0.0
    %2317 = vmatpush2.msra.mxu0 0.0
    %2318 = vmatprep.mubr.f32.mxu0 0.0
    %2319 = vmatmul.mubr.f32.gmra.mxu0 %v2252
    %v2320 = vpop.f32.mrf.mxu0
    %v2321 = vadd.f32 %v2249, %v2320
    %v2322 = vpop.f32.mrf.mxu0
    %2323 = vdwg.mxu0
    %2324 = vst [vmem:[#allocation8] sm:$0x3] %v2321
    // Predicated region
    $region70: #{tpu_custom_call.1} parent=1 // pred_check
      _
    $region71: #{tpu_custom_call.1} parent=1 // pred_check_branch
      %2326 = sbr.rel (0) target = $region73
    $region72: #{tpu_custom_call.1} parent=1 // pred_region
      %s2328 = ssub.s32 32, 32
      %2329 = vsyncadd [#allocation4], %s2328
      %s2331 = sshll.u32 [#allocation8], 4
      %s2332 = int_to_ptr.vmem [resolvable:$true] %s2331
      %2334 = dma.vmem_to_hbm [thread:$0]  %s2332, 32, %s14, [#allocation4]
    $region73: #{tpu_custom_call.1} parent=1 // pred_fallthru
      _
    // Predicated region
    $region74: #{tpu_custom_call.1} parent=1 // pred_check
      _
    $region75: #{tpu_custom_call.1} parent=1 // pred_check_branch
      %2336 = sbr.rel (0) target = $region77
    $region76: #{tpu_custom_call.1} parent=1 // pred_region
      %2337 = dma.done [#allocation4], 32
    $region77: #{tpu_custom_call.1} parent=1 // pred_fallthru
      _
    %2338 = vsyncpa [#allocation3], 1
    %2339 = vsyncpa [#allocation6], 1
    %2340 = vsyncpa [#allocation4], 1

</llo_original>
